<compile_context>
chip_gen: v6e
topology: v6e:2x2x1
jax: 0.10.0
libtpu: 0.0.40
codegen_flags: <defaults>
</compile_context>

<pallas_src>
import functools

import jax
import jax.numpy as jnp
from jax.experimental import pallas as pl
from jax.experimental.pallas import tpu as pltpu

NUM_HIDDEN_LAYERS = 10
LANE = 128


def _round_up(x, m):
    return ((x + m - 1) // m) * m


def _default_bf16_epilogue():
    """bf16 VALU exists on v6e/v7x; keep f32 epilogue on v5e and older chips."""
    try:
        kind = jax.devices()[0].device_kind.lower()
    except Exception:
        return True
    return not any(tag in kind for tag in ("v2", "v3", "v4", "v5"))


def value_net_kernel(x_ref, w1_ref, w_ref, b_ref, wv_ref, bv_ref, out_ref,
                     *, bf16_epilogue):
    """x:(TB,IN_PAD) bf16, w1:(IN_PAD,H) bf16, w:(L-1,H,H) bf16,
    b:(L,1,H) f32, wv:(1,H) f32, bv:(1,1) f32, out:(TB,1) f32."""
    n_rest = w_ref.shape[0]                       # NUM_HIDDEN_LAYERS - 1

    def epilogue(y_f32, b_row):
        if bf16_epilogue:
            # bf16 VPU path (v6e/v7x): half the vregs for the add + max.
            return jnp.maximum(y_f32.astype(jnp.bfloat16)
                               + b_row.astype(jnp.bfloat16), 0)
        return jnp.maximum(y_f32 + b_row, 0.0).astype(jnp.bfloat16)

    # Layer 1: (TB, IN_PAD) @ (IN_PAD, H) on the MXU, f32 accumulation.
    y = jnp.dot(x_ref[...], w1_ref[...], preferred_element_type=jnp.float32)
    h = epilogue(y, b_ref[0])

    # Layers 2 .. L-1 (fully unrolled static loop for LLO visibility).
    for i in range(n_rest - 1):
        y = jnp.dot(h, w_ref[i], preferred_element_type=jnp.float32)
        h = epilogue(y, b_ref[i + 1])

    # Last hidden layer: keep the ReLU output in f32 for the value head.
    y = jnp.dot(h, w_ref[n_rest - 1], preferred_element_type=jnp.float32)
    h_last = jnp.maximum(y + b_ref[n_rest], 0.0)  # (TB, H) f32

    # Final (H -> 1) linear as VPU multiply + lane reduction (no N=1 matmul).
    out_ref[...] = (jnp.sum(h_last * wv_ref[...], axis=-1, keepdims=True)
                    + bv_ref[...])


def _vmem_limit_bytes(tb, in_pad, h, n_layers):
    """Generous scoped-VMEM budget: worst-case double-buffered weights + tiles
    + unrolled-layer temporaries, clamped to a limit valid on every chip."""
    bf16, f32 = 2, 4
    w_bytes = 2 * (in_pad * h + (n_layers - 1) * h * h) * bf16
    b_bytes = 2 * (n_layers * h + h + LANE) * f32
    x_bytes = 2 * tb * in_pad * bf16
    out_bytes = 2 * tb * LANE * f32               # lane-padded output tile
    tmp_bytes = 8 * tb * h * f32                  # unrolled intermediates
    est = w_bytes + b_bytes + x_bytes + out_bytes + tmp_bytes + (4 << 20)
    return int(min(max(2 * est, 32 << 20), 64 << 20))


def value_network_forward(x, packed_params, *, batch_tile=256, bf16_epilogue=None):
    """x: (B, input_dim) f32. packed_params = (w1, w_stack, b_stack, wv_row, bv)."""
    w1, w_stack, b_stack, wv_row, bv = packed_params
    B, in_dim = x.shape
    in_pad, H = w1.shape
    n_layers = w_stack.shape[0] + 1
    assert in_dim <= in_pad

    if bf16_epilogue is None:
        bf16_epilogue = _default_bf16_epilogue()

    # Batch tile: batch_tile rows per MXU pass when possible; otherwise one
    # block covering the (16-padded) batch.
    TB = batch_tile if B >= batch_tile else _round_up(B, 16)
    B_pad = _round_up(B, TB)

    # Pad features to one lane width (zero cols) and batch to B_pad; cast bf16.
    x_pad = jnp.zeros((B_pad, in_pad), jnp.bfloat16)
    x_pad = x_pad.at[:B, :in_dim].set(x.astype(jnp.bfloat16))

    kernel = functools.partial(value_net_kernel, bf16_epilogue=bf16_epilogue)

    flops = 2 * B_pad * (in_pad * H + (n_layers - 1) * H * H + H)
    bytes_accessed = (x_pad.size * 2 + w1.size * 2 + w_stack.size * 2
                      + b_stack.size * 4 + wv_row.size * 4 + bv.size * 4
                      + B_pad * 4)
    compiler_params = pltpu.CompilerParams(
        dimension_semantics=("parallel",),        # shards batch tiles on v7x TCs
        vmem_limit_bytes=_vmem_limit_bytes(TB, in_pad, H, n_layers),
    )
    cost = pl.CostEstimate(flops=int(flops), transcendentals=0,
                           bytes_accessed=int(bytes_accessed))

    def build(single_buffer_weights):
        # Constant-index_map operands gain nothing from double buffering;
        # Buffered(1) halves their resident VMEM.
        wmode = pl.Buffered(1) if single_buffer_weights else None
        in_specs = [
            pl.BlockSpec((TB, in_pad), lambda i: (i, 0)),                # x tile
            pl.BlockSpec((in_pad, H), lambda i: (0, 0),
                         pipeline_mode=wmode),                           # W1
            pl.BlockSpec((n_layers - 1, H, H), lambda i: (0, 0, 0),
                         pipeline_mode=wmode),                           # W2..W10
            pl.BlockSpec((n_layers, 1, H), lambda i: (0, 0, 0),
                         pipeline_mode=wmode),                           # biases
            pl.BlockSpec((1, H), lambda i: (0, 0), pipeline_mode=wmode),  # v weight
            pl.BlockSpec((1, 1), lambda i: (0, 0), pipeline_mode=wmode),  # v bias
        ]
        return pl.pallas_call(
            kernel,
            out_shape=jax.ShapeDtypeStruct((B_pad, 1), jnp.float32),
            grid=(B_pad // TB,),
            in_specs=in_specs,
            out_specs=pl.BlockSpec((TB, 1), lambda i: (i, 0)),
            compiler_params=compiler_params,
            cost_estimate=cost,
        )

    args = (x_pad, w1, w_stack, b_stack, wv_row, bv)
    try:
        out = build(True)(*args)
    except Exception:
        # Older jax / unsupported Buffered(1): fall back to default buffering.
        out = build(False)(*args)
    return out[:B]


# ----------------------------- parameter setup ------------------------------

def init_linear(key, fan_in, fan_out):
    """PyTorch nn.Linear default init: U(-1/sqrt(fan_in), +1/sqrt(fan_in)).
    Weight returned as (fan_in, fan_out) == PyTorch weight.T."""
    kw, kb = jax.random.split(key)
    bound = 1.0 / jnp.sqrt(float(fan_in))
    w = jax.random.uniform(kw, (fan_in, fan_out), jnp.float32, -bound, bound)
    b = jax.random.uniform(kb, (1, fan_out), jnp.float32, -bound, bound)
    return w, b


def make_params(key, input_dim, hidden_dim):
    """Flat f32 param list [w1, b1, ..., w10, b10, wv, bv] (PyTorch-equivalent)."""
    params = []
    dims = [input_dim] + [hidden_dim] * NUM_HIDDEN_LAYERS
    keys = jax.random.split(key, NUM_HIDDEN_LAYERS + 1)
    for i in range(NUM_HIDDEN_LAYERS):
        w, b = init_linear(keys[i], dims[i], dims[i + 1])
        params += [w, b]
    wv, bv = init_linear(keys[-1], hidden_dim, 1)
    params += [wv, bv]
    return params


def pack_params(params, input_dim, hidden_dim):
    """Pack flat f32 params into kernel-friendly arrays.
    W1 is padded only to one lane width (128), not to hidden_dim."""
    H = hidden_dim
    in_pad = max(_round_up(input_dim, LANE), LANE)

    w1 = jnp.zeros((in_pad, H), jnp.float32).at[:input_dim, :].set(params[0])
    w1 = w1.astype(jnp.bfloat16)                              # (IN_PAD, H) bf16

    ws = [params[2 * i] for i in range(1, NUM_HIDDEN_LAYERS)]
    w_stack = jnp.stack(ws).astype(jnp.bfloat16)              # (9, H, H) bf16

    bs = [params[2 * i + 1].reshape(1, H) for i in range(NUM_HIDDEN_LAYERS)]
    b_stack = jnp.stack(bs).astype(jnp.float32)               # (10, 1, H) f32

    wv_row = params[-2].reshape(1, H).astype(jnp.float32)     # (1, H) f32
    bv = params[-1].reshape(1, 1).astype(jnp.float32)         # (1, 1) f32
    return w1, w_stack, b_stack, wv_row, bv


def reference_forward(x, params):
    """Pure-JAX f32 reference matching the PyTorch module."""
    h = x
    for i in range(NUM_HIDDEN_LAYERS):
        h = jnp.maximum(h @ params[2 * i] + params[2 * i + 1], 0.0)
    return h @ params[-2] + params[-1]


if __name__ == "__main__":
    key = jax.random.PRNGKey(0)
    k_params, k_x = jax.random.split(key)

    batch = 8
    input_dim = 16    # stand-in for *input_dims of the PyTorch module
    hidden_dim = 128  # small stand-in for the fc*_dims=512 defaults

    params = make_params(k_params, input_dim, hidden_dim)
    packed = pack_params(params, input_dim, hidden_dim)
    x = jax.random.normal(k_x, (batch, input_dim), jnp.float32)

    v = value_network_forward(x, packed)
    v = jax.block_until_ready(v)

    v_ref = reference_forward(x, params)
    assert v.shape == (batch, 1)
    # bf16 weights/activations with f32 accumulation: loosened tolerance vs f32 ref.
    assert jnp.allclose(v, v_ref, atol=5e-2, rtol=5e-2), (
        f"max abs diff {jnp.max(jnp.abs(v - v_ref))}"
    )

    print("KERNEL_OK")
</pallas_src>

<mosaic_0001>
module attributes {stable_mosaic.version = 11 : i64} {
  func.func @value_net_kernel(%arg0: i32, %arg1: memref<16x128xbf16, #tpu.memory_space<vmem>>, %arg2: memref<128x128xbf16, #tpu.memory_space<vmem>>, %arg3: memref<9x128x128xbf16, #tpu.memory_space<vmem>>, %arg4: memref<10x1x128xf32, #tpu.memory_space<vmem>>, %arg5: memref<1x128xf32, #tpu.memory_space<vmem>>, %arg6: memref<1x1xf32, #tpu.memory_space<vmem>>, %arg7: memref<16x1xf32, #tpu.memory_space<vmem>>) attributes {dimension_semantics = [#tpu.dimension_semantics<parallel>], iteration_bounds = array<i64: 1>, scalar_prefetch = 0 : i64, scratch_operands = 0 : i64, tpu.core_type = #tpu.core_type<tc>, window_params = [{transform_indices = @transform_0, window_bounds = array<i64: 16, 128>}, {pipeline_mode = #tpu.pipeline_mode<synchronous>, transform_indices = @transform_1, window_bounds = array<i64: 128, 128>}, {pipeline_mode = #tpu.pipeline_mode<synchronous>, transform_indices = @transform_2, window_bounds = array<i64: 9, 128, 128>}, {pipeline_mode = #tpu.pipeline_mode<synchronous>, transform_indices = @transform_3, window_bounds = array<i64: 10, 1, 128>}, {pipeline_mode = #tpu.pipeline_mode<synchronous>, transform_indices = @transform_4, window_bounds = array<i64: 1, 128>}, {pipeline_mode = #tpu.pipeline_mode<synchronous>, transform_indices = @transform_5, window_bounds = array<i64: 1, 1>}, {transform_indices = @transform_6, window_bounds = array<i64: 16, 1>}]} {
    %c0 = arith.constant 0 : index
    %c0_0 = arith.constant 0 : index
    %0 = vector.load %arg1[%c0, %c0_0] : memref<16x128xbf16, #tpu.memory_space<vmem>>, vector<16x128xbf16>
    %c0_1 = arith.constant 0 : index
    %c0_2 = arith.constant 0 : index
    %1 = vector.load %arg2[%c0_1, %c0_2] : memref<128x128xbf16, #tpu.memory_space<vmem>>, vector<128x128xbf16>
    %cst = arith.constant dense<0.000000e+00> : vector<16x128xf32>
    %2 = tpu.matmul %0, %1, %cst {dimension_numbers = #tpu.dot_dimension_numbers<[1], [0], [0], [1], [0, 0, 1, 1], [], []>} : vector<16x128xbf16>, vector<128x128xbf16>, vector<16x128xf32> -> vector<16x128xf32>
    %c0_3 = arith.constant 0 : index
    %c0_4 = arith.constant 0 : index
    %c0_5 = arith.constant 0 : index
    %3 = vector.load %arg4[%c0_3, %c0_4, %c0_5] : memref<10x1x128xf32, #tpu.memory_space<vmem>>, vector<1x1x128xf32>
    %4 = vector.shape_cast %3 : vector<1x1x128xf32> to vector<1x128xf32>
    %5 = arith.truncf %2 : vector<16x128xf32> to vector<16x128xbf16>
    %6 = arith.truncf %4 : vector<1x128xf32> to vector<1x128xbf16>
    %7 = vector.broadcast %6 : vector<1x128xbf16> to vector<16x128xbf16>
    %8 = arith.addf %5, %7 : vector<16x128xbf16>
    %cst_6 = arith.constant 0.000000e+00 : bf16
    %9 = vector.broadcast %cst_6 : bf16 to vector<16x128xbf16>
    %10 = arith.maximumf %8, %9 : vector<16x128xbf16>
    %c0_7 = arith.constant 0 : index
    %c0_8 = arith.constant 0 : index
    %c0_9 = arith.constant 0 : index
    %11 = vector.load %arg3[%c0_7, %c0_8, %c0_9] : memref<9x128x128xbf16, #tpu.memory_space<vmem>>, vector<1x128x128xbf16>
    %12 = vector.shape_cast %11 : vector<1x128x128xbf16> to vector<128x128xbf16>
    %cst_10 = arith.constant dense<0.000000e+00> : vector<16x128xf32>
    %13 = tpu.matmul %10, %12, %cst_10 {dimension_numbers = #tpu.dot_dimension_numbers<[1], [0], [0], [1], [0, 0, 1, 1], [], []>} : vector<16x128xbf16>, vector<128x128xbf16>, vector<16x128xf32> -> vector<16x128xf32>
    %c1 = arith.constant 1 : index
    %c0_11 = arith.constant 0 : index
    %c0_12 = arith.constant 0 : index
    %14 = vector.load %arg4[%c1, %c0_11, %c0_12] : memref<10x1x128xf32, #tpu.memory_space<vmem>>, vector<1x1x128xf32>
    %15 = vector.shape_cast %14 : vector<1x1x128xf32> to vector<1x128xf32>
    %16 = arith.truncf %13 : vector<16x128xf32> to vector<16x128xbf16>
    %17 = arith.truncf %15 : vector<1x128xf32> to vector<1x128xbf16>
    %18 = vector.broadcast %17 : vector<1x128xbf16> to vector<16x128xbf16>
    %19 = arith.addf %16, %18 : vector<16x128xbf16>
    %cst_13 = arith.constant 0.000000e+00 : bf16
    %20 = vector.broadcast %cst_13 : bf16 to vector<16x128xbf16>
    %21 = arith.maximumf %19, %20 : vector<16x128xbf16>
    %c1_14 = arith.constant 1 : index
    %c0_15 = arith.constant 0 : index
    %c0_16 = arith.constant 0 : index
    %22 = vector.load %arg3[%c1_14, %c0_15, %c0_16] : memref<9x128x128xbf16, #tpu.memory_space<vmem>>, vector<1x128x128xbf16>
    %23 = vector.shape_cast %22 : vector<1x128x128xbf16> to vector<128x128xbf16>
    %cst_17 = arith.constant dense<0.000000e+00> : vector<16x128xf32>
    %24 = tpu.matmul %21, %23, %cst_17 {dimension_numbers = #tpu.dot_dimension_numbers<[1], [0], [0], [1], [0, 0, 1, 1], [], []>} : vector<16x128xbf16>, vector<128x128xbf16>, vector<16x128xf32> -> vector<16x128xf32>
    %c2 = arith.constant 2 : index
    %c0_18 = arith.constant 0 : index
    %c0_19 = arith.constant 0 : index
    %25 = vector.load %arg4[%c2, %c0_18, %c0_19] : memref<10x1x128xf32, #tpu.memory_space<vmem>>, vector<1x1x128xf32>
    %26 = vector.shape_cast %25 : vector<1x1x128xf32> to vector<1x128xf32>
    %27 = arith.truncf %24 : vector<16x128xf32> to vector<16x128xbf16>
    %28 = arith.truncf %26 : vector<1x128xf32> to vector<1x128xbf16>
    %29 = vector.broadcast %28 : vector<1x128xbf16> to vector<16x128xbf16>
    %30 = arith.addf %27, %29 : vector<16x128xbf16>
    %cst_20 = arith.constant 0.000000e+00 : bf16
    %31 = vector.broadcast %cst_20 : bf16 to vector<16x128xbf16>
    %32 = arith.maximumf %30, %31 : vector<16x128xbf16>
    %c2_21 = arith.constant 2 : index
    %c0_22 = arith.constant 0 : index
    %c0_23 = arith.constant 0 : index
    %33 = vector.load %arg3[%c2_21, %c0_22, %c0_23] : memref<9x128x128xbf16, #tpu.memory_space<vmem>>, vector<1x128x128xbf16>
    %34 = vector.shape_cast %33 : vector<1x128x128xbf16> to vector<128x128xbf16>
    %cst_24 = arith.constant dense<0.000000e+00> : vector<16x128xf32>
    %35 = tpu.matmul %32, %34, %cst_24 {dimension_numbers = #tpu.dot_dimension_numbers<[1], [0], [0], [1], [0, 0, 1, 1], [], []>} : vector<16x128xbf16>, vector<128x128xbf16>, vector<16x128xf32> -> vector<16x128xf32>
    %c3 = arith.constant 3 : index
    %c0_25 = arith.constant 0 : index
    %c0_26 = arith.constant 0 : index
    %36 = vector.load %arg4[%c3, %c0_25, %c0_26] : memref<10x1x128xf32, #tpu.memory_space<vmem>>, vector<1x1x128xf32>
    %37 = vector.shape_cast %36 : vector<1x1x128xf32> to vector<1x128xf32>
    %38 = arith.truncf %35 : vector<16x128xf32> to vector<16x128xbf16>
    %39 = arith.truncf %37 : vector<1x128xf32> to vector<1x128xbf16>
    %40 = vector.broadcast %39 : vector<1x128xbf16> to vector<16x128xbf16>
    %41 = arith.addf %38, %40 : vector<16x128xbf16>
    %cst_27 = arith.constant 0.000000e+00 : bf16
    %42 = vector.broadcast %cst_27 : bf16 to vector<16x128xbf16>
    %43 = arith.maximumf %41, %42 : vector<16x128xbf16>
    %c3_28 = arith.constant 3 : index
    %c0_29 = arith.constant 0 : index
    %c0_30 = arith.constant 0 : index
    %44 = vector.load %arg3[%c3_28, %c0_29, %c0_30] : memref<9x128x128xbf16, #tpu.memory_space<vmem>>, vector<1x128x128xbf16>
    %45 = vector.shape_cast %44 : vector<1x128x128xbf16> to vector<128x128xbf16>
    %cst_31 = arith.constant dense<0.000000e+00> : vector<16x128xf32>
    %46 = tpu.matmul %43, %45, %cst_31 {dimension_numbers = #tpu.dot_dimension_numbers<[1], [0], [0], [1], [0, 0, 1, 1], [], []>} : vector<16x128xbf16>, vector<128x128xbf16>, vector<16x128xf32> -> vector<16x128xf32>
    %c4 = arith.constant 4 : index
    %c0_32 = arith.constant 0 : index
    %c0_33 = arith.constant 0 : index
    %47 = vector.load %arg4[%c4, %c0_32, %c0_33] : memref<10x1x128xf32, #tpu.memory_space<vmem>>, vector<1x1x128xf32>
    %48 = vector.shape_cast %47 : vector<1x1x128xf32> to vector<1x128xf32>
    %49 = arith.truncf %46 : vector<16x128xf32> to vector<16x128xbf16>
    %50 = arith.truncf %48 : vector<1x128xf32> to vector<1x128xbf16>
    %51 = vector.broadcast %50 : vector<1x128xbf16> to vector<16x128xbf16>
    %52 = arith.addf %49, %51 : vector<16x128xbf16>
    %cst_34 = arith.constant 0.000000e+00 : bf16
    %53 = vector.broadcast %cst_34 : bf16 to vector<16x128xbf16>
    %54 = arith.maximumf %52, %53 : vector<16x128xbf16>
    %c4_35 = arith.constant 4 : index
    %c0_36 = arith.constant 0 : index
    %c0_37 = arith.constant 0 : index
    %55 = vector.load %arg3[%c4_35, %c0_36, %c0_37] : memref<9x128x128xbf16, #tpu.memory_space<vmem>>, vector<1x128x128xbf16>
    %56 = vector.shape_cast %55 : vector<1x128x128xbf16> to vector<128x128xbf16>
    %cst_38 = arith.constant dense<0.000000e+00> : vector<16x128xf32>
    %57 = tpu.matmul %54, %56, %cst_38 {dimension_numbers = #tpu.dot_dimension_numbers<[1], [0], [0], [1], [0, 0, 1, 1], [], []>} : vector<16x128xbf16>, vector<128x128xbf16>, vector<16x128xf32> -> vector<16x128xf32>
    %c5 = arith.constant 5 : index
    %c0_39 = arith.constant 0 : index
    %c0_40 = arith.constant 0 : index
    %58 = vector.load %arg4[%c5, %c0_39, %c0_40] : memref<10x1x128xf32, #tpu.memory_space<vmem>>, vector<1x1x128xf32>
    %59 = vector.shape_cast %58 : vector<1x1x128xf32> to vector<1x128xf32>
    %60 = arith.truncf %57 : vector<16x128xf32> to vector<16x128xbf16>
    %61 = arith.truncf %59 : vector<1x128xf32> to vector<1x128xbf16>
    %62 = vector.broadcast %61 : vector<1x128xbf16> to vector<16x128xbf16>
    %63 = arith.addf %60, %62 : vector<16x128xbf16>
    %cst_41 = arith.constant 0.000000e+00 : bf16
    %64 = vector.broadcast %cst_41 : bf16 to vector<16x128xbf16>
    %65 = arith.maximumf %63, %64 : vector<16x128xbf16>
    %c5_42 = arith.constant 5 : index
    %c0_43 = arith.constant 0 : index
    %c0_44 = arith.constant 0 : index
    %66 = vector.load %arg3[%c5_42, %c0_43, %c0_44] : memref<9x128x128xbf16, #tpu.memory_space<vmem>>, vector<1x128x128xbf16>
    %67 = vector.shape_cast %66 : vector<1x128x128xbf16> to vector<128x128xbf16>
    %cst_45 = arith.constant dense<0.000000e+00> : vector<16x128xf32>
    %68 = tpu.matmul %65, %67, %cst_45 {dimension_numbers = #tpu.dot_dimension_numbers<[1], [0], [0], [1], [0, 0, 1, 1], [], []>} : vector<16x128xbf16>, vector<128x128xbf16>, vector<16x128xf32> -> vector<16x128xf32>
    %c6 = arith.constant 6 : index
    %c0_46 = arith.constant 0 : index
    %c0_47 = arith.constant 0 : index
    %69 = vector.load %arg4[%c6, %c0_46, %c0_47] : memref<10x1x128xf32, #tpu.memory_space<vmem>>, vector<1x1x128xf32>
    %70 = vector.shape_cast %69 : vector<1x1x128xf32> to vector<1x128xf32>
    %71 = arith.truncf %68 : vector<16x128xf32> to vector<16x128xbf16>
    %72 = arith.truncf %70 : vector<1x128xf32> to vector<1x128xbf16>
    %73 = vector.broadcast %72 : vector<1x128xbf16> to vector<16x128xbf16>
    %74 = arith.addf %71, %73 : vector<16x128xbf16>
    %cst_48 = arith.constant 0.000000e+00 : bf16
    %75 = vector.broadcast %cst_48 : bf16 to vector<16x128xbf16>
    %76 = arith.maximumf %74, %75 : vector<16x128xbf16>
    %c6_49 = arith.constant 6 : index
    %c0_50 = arith.constant 0 : index
    %c0_51 = arith.constant 0 : index
    %77 = vector.load %arg3[%c6_49, %c0_50, %c0_51] : memref<9x128x128xbf16, #tpu.memory_space<vmem>>, vector<1x128x128xbf16>
    %78 = vector.shape_cast %77 : vector<1x128x128xbf16> to vector<128x128xbf16>
    %cst_52 = arith.constant dense<0.000000e+00> : vector<16x128xf32>
    %79 = tpu.matmul %76, %78, %cst_52 {dimension_numbers = #tpu.dot_dimension_numbers<[1], [0], [0], [1], [0, 0, 1, 1], [], []>} : vector<16x128xbf16>, vector<128x128xbf16>, vector<16x128xf32> -> vector<16x128xf32>
    %c7 = arith.constant 7 : index
    %c0_53 = arith.constant 0 : index
    %c0_54 = arith.constant 0 : index
    %80 = vector.load %arg4[%c7, %c0_53, %c0_54] : memref<10x1x128xf32, #tpu.memory_space<vmem>>, vector<1x1x128xf32>
    %81 = vector.shape_cast %80 : vector<1x1x128xf32> to vector<1x128xf32>
    %82 = arith.truncf %79 : vector<16x128xf32> to vector<16x128xbf16>
    %83 = arith.truncf %81 : vector<1x128xf32> to vector<1x128xbf16>
    %84 = vector.broadcast %83 : vector<1x128xbf16> to vector<16x128xbf16>
    %85 = arith.addf %82, %84 : vector<16x128xbf16>
    %cst_55 = arith.constant 0.000000e+00 : bf16
    %86 = vector.broadcast %cst_55 : bf16 to vector<16x128xbf16>
    %87 = arith.maximumf %85, %86 : vector<16x128xbf16>
    %c7_56 = arith.constant 7 : index
    %c0_57 = arith.constant 0 : index
    %c0_58 = arith.constant 0 : index
    %88 = vector.load %arg3[%c7_56, %c0_57, %c0_58] : memref<9x128x128xbf16, #tpu.memory_space<vmem>>, vector<1x128x128xbf16>
    %89 = vector.shape_cast %88 : vector<1x128x128xbf16> to vector<128x128xbf16>
    %cst_59 = arith.constant dense<0.000000e+00> : vector<16x128xf32>
    %90 = tpu.matmul %87, %89, %cst_59 {dimension_numbers = #tpu.dot_dimension_numbers<[1], [0], [0], [1], [0, 0, 1, 1], [], []>} : vector<16x128xbf16>, vector<128x128xbf16>, vector<16x128xf32> -> vector<16x128xf32>
    %c8 = arith.constant 8 : index
    %c0_60 = arith.constant 0 : index
    %c0_61 = arith.constant 0 : index
    %91 = vector.load %arg4[%c8, %c0_60, %c0_61] : memref<10x1x128xf32, #tpu.memory_space<vmem>>, vector<1x1x128xf32>
    %92 = vector.shape_cast %91 : vector<1x1x128xf32> to vector<1x128xf32>
    %93 = arith.truncf %90 : vector<16x128xf32> to vector<16x128xbf16>
    %94 = arith.truncf %92 : vector<1x128xf32> to vector<1x128xbf16>
    %95 = vector.broadcast %94 : vector<1x128xbf16> to vector<16x128xbf16>
    %96 = arith.addf %93, %95 : vector<16x128xbf16>
    %cst_62 = arith.constant 0.000000e+00 : bf16
    %97 = vector.broadcast %cst_62 : bf16 to vector<16x128xbf16>
    %98 = arith.maximumf %96, %97 : vector<16x128xbf16>
    %c8_63 = arith.constant 8 : index
    %c0_64 = arith.constant 0 : index
    %c0_65 = arith.constant 0 : index
    %99 = vector.load %arg3[%c8_63, %c0_64, %c0_65] : memref<9x128x128xbf16, #tpu.memory_space<vmem>>, vector<1x128x128xbf16>
    %100 = vector.shape_cast %99 : vector<1x128x128xbf16> to vector<128x128xbf16>
    %cst_66 = arith.constant dense<0.000000e+00> : vector<16x128xf32>
    %101 = tpu.matmul %98, %100, %cst_66 {dimension_numbers = #tpu.dot_dimension_numbers<[1], [0], [0], [1], [0, 0, 1, 1], [], []>} : vector<16x128xbf16>, vector<128x128xbf16>, vector<16x128xf32> -> vector<16x128xf32>
    %c9 = arith.constant 9 : index
    %c0_67 = arith.constant 0 : index
    %c0_68 = arith.constant 0 : index
    %102 = vector.load %arg4[%c9, %c0_67, %c0_68] : memref<10x1x128xf32, #tpu.memory_space<vmem>>, vector<1x1x128xf32>
    %103 = vector.shape_cast %102 : vector<1x1x128xf32> to vector<1x128xf32>
    %104 = vector.broadcast %103 : vector<1x128xf32> to vector<16x128xf32>
    %105 = arith.addf %101, %104 : vector<16x128xf32>
    %cst_69 = arith.constant 0.000000e+00 : f32
    %106 = vector.broadcast %cst_69 : f32 to vector<16x128xf32>
    %107 = arith.maximumf %105, %106 : vector<16x128xf32>
    %c0_70 = arith.constant 0 : index
    %c0_71 = arith.constant 0 : index
    %108 = vector.load %arg5[%c0_70, %c0_71] : memref<1x128xf32, #tpu.memory_space<vmem>>, vector<1x128xf32>
    %109 = vector.broadcast %108 : vector<1x128xf32> to vector<16x128xf32>
    %110 = arith.mulf %107, %109 : vector<16x128xf32>
    %cst_72 = arith.constant dense<0.000000e+00> : vector<16xf32>
    %111 = vector.multi_reduction <add>, %110, %cst_72 [1] : vector<16x128xf32> to vector<16xf32>
    %112 = vector.shape_cast %111 : vector<16xf32> to vector<16x1xf32>
    %c0_73 = arith.constant 0 : index
    %c0_74 = arith.constant 0 : index
    %113 = vector.load %arg6[%c0_73, %c0_74] : memref<1x1xf32, #tpu.memory_space<vmem>>, vector<1x1xf32>
    %114 = vector.broadcast %113 : vector<1x1xf32> to vector<16x1xf32>
    %115 = arith.addf %112, %114 : vector<16x1xf32>
    %c0_75 = arith.constant 0 : index
    %c0_76 = arith.constant 0 : index
    %116 = vector.load %arg7[%c0_75, %c0_76] : memref<16x1xf32, #tpu.memory_space<vmem>>, vector<16x1xf32>
    tpu.vector_store %arg7[%c0_75, %c0_76], %115 {strides = array<i32>} : memref<16x1xf32, #tpu.memory_space<vmem>>, vector<16x1xf32>,
    return
  }
  func.func @transform_0(%arg0: i32) -> (i32, i32) {
    %c0_i32 = arith.constant 0 : i32
    %c0_i32_0 = arith.constant 0 : i32
    return %arg0, %c0_i32 : i32, i32
  }
  func.func @transform_1(%arg0: i32) -> (i32, i32) {
    %c0_i32 = arith.constant 0 : i32
    %c0_i32_0 = arith.constant 0 : i32
    %c0_i32_1 = arith.constant 0 : i32
    return %c0_i32, %c0_i32_0 : i32, i32
  }
  func.func @transform_2(%arg0: i32) -> (i32, i32, i32) {
    %c0_i32 = arith.constant 0 : i32
    %c0_i32_0 = arith.constant 0 : i32
    %c0_i32_1 = arith.constant 0 : i32
    %c0_i32_2 = arith.constant 0 : i32
    return %c0_i32, %c0_i32_0, %c0_i32_1 : i32, i32, i32
  }
  func.func @transform_3(%arg0: i32) -> (i32, i32, i32) {
    %c0_i32 = arith.constant 0 : i32
    %c0_i32_0 = arith.constant 0 : i32
    %c0_i32_1 = arith.constant 0 : i32
    %c0_i32_2 = arith.constant 0 : i32
    return %c0_i32, %c0_i32_0, %c0_i32_1 : i32, i32, i32
  }
  func.func @transform_4(%arg0: i32) -> (i32, i32) {
    %c0_i32 = arith.constant 0 : i32
    %c0_i32_0 = arith.constant 0 : i32
    %c0_i32_1 = arith.constant 0 : i32
    return %c0_i32, %c0_i32_0 : i32, i32
  }
  func.func @transform_5(%arg0: i32) -> (i32, i32) {
    %c0_i32 = arith.constant 0 : i32
    %c0_i32_0 = arith.constant 0 : i32
    %c0_i32_1 = arith.constant 0 : i32
    return %c0_i32, %c0_i32_0 : i32, i32
  }
  func.func @transform_6(%arg0: i32) -> (i32, i32) {
    %c0_i32 = arith.constant 0 : i32
    %c0_i32_0 = arith.constant 0 : i32
    return %arg0, %c0_i32 : i32, i32
  }
}

module attributes {stable_mosaic.version = 11 : i64} {
  func.func @value_net_kernel(%arg0: i32, %arg1: memref<16x128xbf16, #tpu.memory_space<vmem>>, %arg2: memref<128x128xbf16, #tpu.memory_space<vmem>>, %arg3: memref<9x128x128xbf16, #tpu.memory_space<vmem>>, %arg4: memref<10x1x128xf32, #tpu.memory_space<vmem>>, %arg5: memref<1x128xf32, #tpu.memory_space<vmem>>, %arg6: memref<1x1xf32, #tpu.memory_space<vmem>>, %arg7: memref<16x1xf32, #tpu.memory_space<vmem>>) attributes {dimension_semantics = [#tpu.dimension_semantics<parallel>], iteration_bounds = array<i64: 1>, scalar_prefetch = 0 : i64, scratch_operands = 0 : i64, tpu.core_type = #tpu.core_type<tc>, window_params = [{transform_indices = @transform_0, window_bounds = array<i64: 16, 128>}, {pipeline_mode = #tpu.pipeline_mode<synchronous>, transform_indices = @transform_1, window_bounds = array<i64: 128, 128>}, {pipeline_mode = #tpu.pipeline_mode<synchronous>, transform_indices = @transform_2, window_bounds = array<i64: 9, 128, 128>}, {pipeline_mode = #tpu.pipeline_mode<synchronous>, transform_indices = @transform_3, window_bounds = array<i64: 10, 1, 128>}, {pipeline_mode = #tpu.pipeline_mode<synchronous>, transform_indices = @transform_4, window_bounds = array<i64: 1, 128>}, {pipeline_mode = #tpu.pipeline_mode<synchronous>, transform_indices = @transform_5, window_bounds = array<i64: 1, 1>}, {transform_indices = @transform_6, window_bounds = array<i64: 16, 1>}]} {
    %c0 = arith.constant 0 : index
    %c0_0 = arith.constant 0 : index
    %0 = vector.load %arg1[%c0, %c0_0] : memref<16x128xbf16, #tpu.memory_space<vmem>>, vector<16x128xbf16>
    %c0_1 = arith.constant 0 : index
    %c0_2 = arith.constant 0 : index
    %1 = vector.load %arg2[%c0_1, %c0_2] : memref<128x128xbf16, #tpu.memory_space<vmem>>, vector<128x128xbf16>
    %cst = arith.constant dense<0.000000e+00> : vector<16x128xf32>
    %2 = tpu.matmul %0, %1, %cst {dimension_numbers = #tpu.dot_dimension_numbers<[1], [0], [0], [1], [0, 0, 1, 1], [], []>} : vector<16x128xbf16>, vector<128x128xbf16>, vector<16x128xf32> -> vector<16x128xf32>
    %c0_3 = arith.constant 0 : index
    %c0_4 = arith.constant 0 : index
    %c0_5 = arith.constant 0 : index
    %3 = vector.load %arg4[%c0_3, %c0_4, %c0_5] : memref<10x1x128xf32, #tpu.memory_space<vmem>>, vector<1x1x128xf32>
    %4 = vector.shape_cast %3 : vector<1x1x128xf32> to vector<1x128xf32>
    %5 = arith.truncf %2 : vector<16x128xf32> to vector<16x128xbf16>
    %6 = arith.truncf %4 : vector<1x128xf32> to vector<1x128xbf16>
    %7 = vector.broadcast %6 : vector<1x128xbf16> to vector<16x128xbf16>
    %8 = arith.addf %5, %7 : vector<16x128xbf16>
    %cst_6 = arith.constant 0.000000e+00 : bf16
    %9 = vector.broadcast %cst_6 : bf16 to vector<16x128xbf16>
    %10 = arith.maximumf %8, %9 : vector<16x128xbf16>
    %c0_7 = arith.constant 0 : index
    %c0_8 = arith.constant 0 : index
    %c0_9 = arith.constant 0 : index
    %11 = vector.load %arg3[%c0_7, %c0_8, %c0_9] : memref<9x128x128xbf16, #tpu.memory_space<vmem>>, vector<1x128x128xbf16>
    %12 = vector.shape_cast %11 : vector<1x128x128xbf16> to vector<128x128xbf16>
    %cst_10 = arith.constant dense<0.000000e+00> : vector<16x128xf32>
    %13 = tpu.matmul %10, %12, %cst_10 {dimension_numbers = #tpu.dot_dimension_numbers<[1], [0], [0], [1], [0, 0, 1, 1], [], []>} : vector<16x128xbf16>, vector<128x128xbf16>, vector<16x128xf32> -> vector<16x128xf32>
    %c1 = arith.constant 1 : index
    %c0_11 = arith.constant 0 : index
    %c0_12 = arith.constant 0 : index
    %14 = vector.load %arg4[%c1, %c0_11, %c0_12] : memref<10x1x128xf32, #tpu.memory_space<vmem>>, vector<1x1x128xf32>
    %15 = vector.shape_cast %14 : vector<1x1x128xf32> to vector<1x128xf32>
    %16 = arith.truncf %13 : vector<16x128xf32> to vector<16x128xbf16>
    %17 = arith.truncf %15 : vector<1x128xf32> to vector<1x128xbf16>
    %18 = vector.broadcast %17 : vector<1x128xbf16> to vector<16x128xbf16>
    %19 = arith.addf %16, %18 : vector<16x128xbf16>
    %cst_13 = arith.constant 0.000000e+00 : bf16
    %20 = vector.broadcast %cst_13 : bf16 to vector<16x128xbf16>
    %21 = arith.maximumf %19, %20 : vector<16x128xbf16>
    %c1_14 = arith.constant 1 : index
    %c0_15 = arith.constant 0 : index
    %c0_16 = arith.constant 0 : index
    %22 = vector.load %arg3[%c1_14, %c0_15, %c0_16] : memref<9x128x128xbf16, #tpu.memory_space<vmem>>, vector<1x128x128xbf16>
    %23 = vector.shape_cast %22 : vector<1x128x128xbf16> to vector<128x128xbf16>
    %cst_17 = arith.constant dense<0.000000e+00> : vector<16x128xf32>
    %24 = tpu.matmul %21, %23, %cst_17 {dimension_numbers = #tpu.dot_dimension_numbers<[1], [0], [0], [1], [0, 0, 1, 1], [], []>} : vector<16x128xbf16>, vector<128x128xbf16>, vector<16x128xf32> -> vector<16x128xf32>
    %c2 = arith.constant 2 : index
    %c0_18 = arith.constant 0 : index
    %c0_19 = arith.constant 0 : index
    %25 = vector.load %arg4[%c2, %c0_18, %c0_19] : memref<10x1x128xf32, #tpu.memory_space<vmem>>, vector<1x1x128xf32>
    %26 = vector.shape_cast %25 : vector<1x1x128xf32> to vector<1x128xf32>
    %27 = arith.truncf %24 : vector<16x128xf32> to vector<16x128xbf16>
    %28 = arith.truncf %26 : vector<1x128xf32> to vector<1x128xbf16>
    %29 = vector.broadcast %28 : vector<1x128xbf16> to vector<16x128xbf16>
    %30 = arith.addf %27, %29 : vector<16x128xbf16>
    %cst_20 = arith.constant 0.000000e+00 : bf16
    %31 = vector.broadcast %cst_20 : bf16 to vector<16x128xbf16>
    %32 = arith.maximumf %30, %31 : vector<16x128xbf16>
    %c2_21 = arith.constant 2 : index
    %c0_22 = arith.constant 0 : index
    %c0_23 = arith.constant 0 : index
    %33 = vector.load %arg3[%c2_21, %c0_22, %c0_23] : memref<9x128x128xbf16, #tpu.memory_space<vmem>>, vector<1x128x128xbf16>
    %34 = vector.shape_cast %33 : vector<1x128x128xbf16> to vector<128x128xbf16>
    %cst_24 = arith.constant dense<0.000000e+00> : vector<16x128xf32>
    %35 = tpu.matmul %32, %34, %cst_24 {dimension_numbers = #tpu.dot_dimension_numbers<[1], [0], [0], [1], [0, 0, 1, 1], [], []>} : vector<16x128xbf16>, vector<128x128xbf16>, vector<16x128xf32> -> vector<16x128xf32>
    %c3 = arith.constant 3 : index
    %c0_25 = arith.constant 0 : index
    %c0_26 = arith.constant 0 : index
    %36 = vector.load %arg4[%c3, %c0_25, %c0_26] : memref<10x1x128xf32, #tpu.memory_space<vmem>>, vector<1x1x128xf32>
    %37 = vector.shape_cast %36 : vector<1x1x128xf32> to vector<1x128xf32>
    %38 = arith.truncf %35 : vector<16x128xf32> to vector<16x128xbf16>
    %39 = arith.truncf %37 : vector<1x128xf32> to vector<1x128xbf16>
    %40 = vector.broadcast %39 : vector<1x128xbf16> to vector<16x128xbf16>
    %41 = arith.addf %38, %40 : vector<16x128xbf16>
    %cst_27 = arith.constant 0.000000e+00 : bf16
    %42 = vector.broadcast %cst_27 : bf16 to vector<16x128xbf16>
    %43 = arith.maximumf %41, %42 : vector<16x128xbf16>
    %c3_28 = arith.constant 3 : index
    %c0_29 = arith.constant 0 : index
    %c0_30 = arith.constant 0 : index
    %44 = vector.load %arg3[%c3_28, %c0_29, %c0_30] : memref<9x128x128xbf16, #tpu.memory_space<vmem>>, vector<1x128x128xbf16>
    %45 = vector.shape_cast %44 : vector<1x128x128xbf16> to vector<128x128xbf16>
    %cst_31 = arith.constant dense<0.000000e+00> : vector<16x128xf32>
    %46 = tpu.matmul %43, %45, %cst_31 {dimension_numbers = #tpu.dot_dimension_numbers<[1], [0], [0], [1], [0, 0, 1, 1], [], []>} : vector<16x128xbf16>, vector<128x128xbf16>, vector<16x128xf32> -> vector<16x128xf32>
    %c4 = arith.constant 4 : index
    %c0_32 = arith.constant 0 : index
    %c0_33 = arith.constant 0 : index
    %47 = vector.load %arg4[%c4, %c0_32, %c0_33] : memref<10x1x128xf32, #tpu.memory_space<vmem>>, vector<1x1x128xf32>
    %48 = vector.shape_cast %47 : vector<1x1x128xf32> to vector<1x128xf32>
    %49 = arith.truncf %46 : vector<16x128xf32> to vector<16x128xbf16>
    %50 = arith.truncf %48 : vector<1x128xf32> to vector<1x128xbf16>
    %51 = vector.broadcast %50 : vector<1x128xbf16> to vector<16x128xbf16>
    %52 = arith.addf %49, %51 : vector<16x128xbf16>
    %cst_34 = arith.constant 0.000000e+00 : bf16
    %53 = vector.broadcast %cst_34 : bf16 to vector<16x128xbf16>
    %54 = arith.maximumf %52, %53 : vector<16x128xbf16>
    %c4_35 = arith.constant 4 : index
    %c0_36 = arith.constant 0 : index
    %c0_37 = arith.constant 0 : index
    %55 = vector.load %arg3[%c4_35, %c0_36, %c0_37] : memref<9x128x128xbf16, #tpu.memory_space<vmem>>, vector<1x128x128xbf16>
    %56 = vector.shape_cast %55 : vector<1x128x128xbf16> to vector<128x128xbf16>
    %cst_38 = arith.constant dense<0.000000e+00> : vector<16x128xf32>
    %57 = tpu.matmul %54, %56, %cst_38 {dimension_numbers = #tpu.dot_dimension_numbers<[1], [0], [0], [1], [0, 0, 1, 1], [], []>} : vector<16x128xbf16>, vector<128x128xbf16>, vector<16x128xf32> -> vector<16x128xf32>
    %c5 = arith.constant 5 : index
    %c0_39 = arith.constant 0 : index
    %c0_40 = arith.constant 0 : index
    %58 = vector.load %arg4[%c5, %c0_39, %c0_40] : memref<10x1x128xf32, #tpu.memory_space<vmem>>, vector<1x1x128xf32>
    %59 = vector.shape_cast %58 : vector<1x1x128xf32> to vector<1x128xf32>
    %60 = arith.truncf %57 : vector<16x128xf32> to vector<16x128xbf16>
    %61 = arith.truncf %59 : vector<1x128xf32> to vector<1x128xbf16>
    %62 = vector.broadcast %61 : vector<1x128xbf16> to vector<16x128xbf16>
    %63 = arith.addf %60, %62 : vector<16x128xbf16>
    %cst_41 = arith.constant 0.000000e+00 : bf16
    %64 = vector.broadcast %cst_41 : bf16 to vector<16x128xbf16>
    %65 = arith.maximumf %63, %64 : vector<16x128xbf16>
    %c5_42 = arith.constant 5 : index
    %c0_43 = arith.constant 0 : index
    %c0_44 = arith.constant 0 : index
    %66 = vector.load %arg3[%c5_42, %c0_43, %c0_44] : memref<9x128x128xbf16, #tpu.memory_space<vmem>>, vector<1x128x128xbf16>
    %67 = vector.shape_cast %66 : vector<1x128x128xbf16> to vector<128x128xbf16>
    %cst_45 = arith.constant dense<0.000000e+00> : vector<16x128xf32>
    %68 = tpu.matmul %65, %67, %cst_45 {dimension_numbers = #tpu.dot_dimension_numbers<[1], [0], [0], [1], [0, 0, 1, 1], [], []>} : vector<16x128xbf16>, vector<128x128xbf16>, vector<16x128xf32> -> vector<16x128xf32>
    %c6 = arith.constant 6 : index
    %c0_46 = arith.constant 0 : index
    %c0_47 = arith.constant 0 : index
    %69 = vector.load %arg4[%c6, %c0_46, %c0_47] : memref<10x1x128xf32, #tpu.memory_space<vmem>>, vector<1x1x128xf32>
    %70 = vector.shape_cast %69 : vector<1x1x128xf32> to vector<1x128xf32>
    %71 = arith.truncf %68 : vector<16x128xf32> to vector<16x128xbf16>
    %72 = arith.truncf %70 : vector<1x128xf32> to vector<1x128xbf16>
    %73 = vector.broadcast %72 : vector<1x128xbf16> to vector<16x128xbf16>
    %74 = arith.addf %71, %73 : vector<16x128xbf16>
    %cst_48 = arith.constant 0.000000e+00 : bf16
    %75 = vector.broadcast %cst_48 : bf16 to vector<16x128xbf16>
    %76 = arith.maximumf %74, %75 : vector<16x128xbf16>
    %c6_49 = arith.constant 6 : index
    %c0_50 = arith.constant 0 : index
    %c0_51 = arith.constant 0 : index
    %77 = vector.load %arg3[%c6_49, %c0_50, %c0_51] : memref<9x128x128xbf16, #tpu.memory_space<vmem>>, vector<1x128x128xbf16>
    %78 = vector.shape_cast %77 : vector<1x128x128xbf16> to vector<128x128xbf16>
    %cst_52 = arith.constant dense<0.000000e+00> : vector<16x128xf32>
    %79 = tpu.matmul %76, %78, %cst_52 {dimension_numbers = #tpu.dot_dimension_numbers<[1], [0], [0], [1], [0, 0, 1, 1], [], []>} : vector<16x128xbf16>, vector<128x128xbf16>, vector<16x128xf32> -> vector<16x128xf32>
    %c7 = arith.constant 7 : index
    %c0_53 = arith.constant 0 : index
    %c0_54 = arith.constant 0 : index
    %80 = vector.load %arg4[%c7, %c0_53, %c0_54] : memref<10x1x128xf32, #tpu.memory_space<vmem>>, vector<1x1x128xf32>
    %81 = vector.shape_cast %80 : vector<1x1x128xf32> to vector<1x128xf32>
    %82 = arith.truncf %79 : vector<16x128xf32> to vector<16x128xbf16>
    %83 = arith.truncf %81 : vector<1x128xf32> to vector<1x128xbf16>
    %84 = vector.broadcast %83 : vector<1x128xbf16> to vector<16x128xbf16>
    %85 = arith.addf %82, %84 : vector<16x128xbf16>
    %cst_55 = arith.constant 0.000000e+00 : bf16
    %86 = vector.broadcast %cst_55 : bf16 to vector<16x128xbf16>
    %87 = arith.maximumf %85, %86 : vector<16x128xbf16>
    %c7_56 = arith.constant 7 : index
    %c0_57 = arith.constant 0 : index
    %c0_58 = arith.constant 0 : index
    %88 = vector.load %arg3[%c7_56, %c0_57, %c0_58] : memref<9x128x128xbf16, #tpu.memory_space<vmem>>, vector<1x128x128xbf16>
    %89 = vector.shape_cast %88 : vector<1x128x128xbf16> to vector<128x128xbf16>
    %cst_59 = arith.constant dense<0.000000e+00> : vector<16x128xf32>
    %90 = tpu.matmul %87, %89, %cst_59 {dimension_numbers = #tpu.dot_dimension_numbers<[1], [0], [0], [1], [0, 0, 1, 1], [], []>} : vector<16x128xbf16>, vector<128x128xbf16>, vector<16x128xf32> -> vector<16x128xf32>
    %c8 = arith.constant 8 : index
    %c0_60 = arith.constant 0 : index
    %c0_61 = arith.constant 0 : index
    %91 = vector.load %arg4[%c8, %c0_60, %c0_61] : memref<10x1x128xf32, #tpu.memory_space<vmem>>, vector<1x1x128xf32>
    %92 = vector.shape_cast %91 : vector<1x1x128xf32> to vector<1x128xf32>
    %93 = arith.truncf %90 : vector<16x128xf32> to vector<16x128xbf16>
    %94 = arith.truncf %92 : vector<1x128xf32> to vector<1x128xbf16>
    %95 = vector.broadcast %94 : vector<1x128xbf16> to vector<16x128xbf16>
    %96 = arith.addf %93, %95 : vector<16x128xbf16>
    %cst_62 = arith.constant 0.000000e+00 : bf16
    %97 = vector.broadcast %cst_62 : bf16 to vector<16x128xbf16>
    %98 = arith.maximumf %96, %97 : vector<16x128xbf16>
    %c8_63 = arith.constant 8 : index
    %c0_64 = arith.constant 0 : index
    %c0_65 = arith.constant 0 : index
    %99 = vector.load %arg3[%c8_63, %c0_64, %c0_65] : memref<9x128x128xbf16, #tpu.memory_space<vmem>>, vector<1x128x128xbf16>
    %100 = vector.shape_cast %99 : vector<1x128x128xbf16> to vector<128x128xbf16>
    %cst_66 = arith.constant dense<0.000000e+00> : vector<16x128xf32>
    %101 = tpu.matmul %98, %100, %cst_66 {dimension_numbers = #tpu.dot_dimension_numbers<[1], [0], [0], [1], [0, 0, 1, 1], [], []>} : vector<16x128xbf16>, vector<128x128xbf16>, vector<16x128xf32> -> vector<16x128xf32>
    %c9 = arith.constant 9 : index
    %c0_67 = arith.constant 0 : index
    %c0_68 = arith.constant 0 : index
    %102 = vector.load %arg4[%c9, %c0_67, %c0_68] : memref<10x1x128xf32, #tpu.memory_space<vmem>>, vector<1x1x128xf32>
    %103 = vector.shape_cast %102 : vector<1x1x128xf32> to vector<1x128xf32>
    %104 = vector.broadcast %103 : vector<1x128xf32> to vector<16x128xf32>
    %105 = arith.addf %101, %104 : vector<16x128xf32>
    %cst_69 = arith.constant 0.000000e+00 : f32
    %106 = vector.broadcast %cst_69 : f32 to vector<16x128xf32>
    %107 = arith.maximumf %105, %106 : vector<16x128xf32>
    %c0_70 = arith.constant 0 : index
    %c0_71 = arith.constant 0 : index
    %108 = vector.load %arg5[%c0_70, %c0_71] : memref<1x128xf32, #tpu.memory_space<vmem>>, vector<1x128xf32>
    %109 = vector.broadcast %108 : vector<1x128xf32> to vector<16x128xf32>
    %110 = arith.mulf %107, %109 : vector<16x128xf32>
    %cst_72 = arith.constant dense<0.000000e+00> : vector<16xf32>
    %111 = vector.multi_reduction <add>, %110, %cst_72 [1] : vector<16x128xf32> to vector<16xf32>
    %112 = vector.shape_cast %111 : vector<16xf32> to vector<16x1xf32>
    %c0_73 = arith.constant 0 : index
    %c0_74 = arith.constant 0 : index
    %113 = vector.load %arg6[%c0_73, %c0_74] : memref<1x1xf32, #tpu.memory_space<vmem>>, vector<1x1xf32>
    %114 = vector.broadcast %113 : vector<1x1xf32> to vector<16x1xf32>
    %115 = arith.addf %112, %114 : vector<16x1xf32>
    %c0_75 = arith.constant 0 : index
    %c0_76 = arith.constant 0 : index
    %116 = vector.load %arg7[%c0_75, %c0_76] : memref<16x1xf32, #tpu.memory_space<vmem>>, vector<16x1xf32>
    tpu.vector_store %arg7[%c0_75, %c0_76], %115 {strides = array<i32>} : memref<16x1xf32, #tpu.memory_space<vmem>>, vector<16x1xf32>,
    return
  }
  func.func @transform_0(%arg0: i32) -> (i32, i32) {
    %c0_i32 = arith.constant 0 : i32
    %c0_i32_0 = arith.constant 0 : i32
    return %arg0, %c0_i32 : i32, i32
  }
  func.func @transform_1(%arg0: i32) -> (i32, i32) {
    %c0_i32 = arith.constant 0 : i32
    %c0_i32_0 = arith.constant 0 : i32
    %c0_i32_1 = arith.constant 0 : i32
    return %c0_i32, %c0_i32_0 : i32, i32
  }
  func.func @transform_2(%arg0: i32) -> (i32, i32, i32) {
    %c0_i32 = arith.constant 0 : i32
    %c0_i32_0 = arith.constant 0 : i32
    %c0_i32_1 = arith.constant 0 : i32
    %c0_i32_2 = arith.constant 0 : i32
    return %c0_i32, %c0_i32_0, %c0_i32_1 : i32, i32, i32
  }
  func.func @transform_3(%arg0: i32) -> (i32, i32, i32) {
    %c0_i32 = arith.constant 0 : i32
    %c0_i32_0 = arith.constant 0 : i32
    %c0_i32_1 = arith.constant 0 : i32
    %c0_i32_2 = arith.constant 0 : i32
    return %c0_i32, %c0_i32_0, %c0_i32_1 : i32, i32, i32
  }
  func.func @transform_4(%arg0: i32) -> (i32, i32) {
    %c0_i32 = arith.constant 0 : i32
    %c0_i32_0 = arith.constant 0 : i32
    %c0_i32_1 = arith.constant 0 : i32
    return %c0_i32, %c0_i32_0 : i32, i32
  }
  func.func @transform_5(%arg0: i32) -> (i32, i32) {
    %c0_i32 = arith.constant 0 : i32
    %c0_i32_0 = arith.constant 0 : i32
    %c0_i32_1 = arith.constant 0 : i32
    return %c0_i32, %c0_i32_0 : i32, i32
  }
  func.func @transform_6(%arg0: i32) -> (i32, i32) {
    %c0_i32 = arith.constant 0 : i32
    %c0_i32_0 = arith.constant 0 : i32
    return %arg0, %c0_i32 : i32, i32
  }
}

</mosaic_0001>

<llo_original>
// kernel: tpu_custom_call.1
$region0: #{tpu_custom_call.1}
  #allocation0 [shape = 'u32[]', space=smem, size = 0x4, offset = 0x4, fixed_abs, tag = 'smem constant byte address 0x4 - core index']
  #allocation1 [shape = 'u32[144,128]{1,0:T(1,128)}', space=vmem, size = 0x12000, scoped, tag = 'internal scratch']
  #allocation2 [shape = 'f32[1,1]{1,0:T(1,128)S(1)}', space=vmem, size = 0x200, scoped, tag = 'scoped memory for tpu_custom_call.1']
  %s0 = inlined_call_operand.hbm [shape: bf16[16,128], index: 0, kind: input, shape index: {}]
  %s1 = inlined_call_operand.hbm [shape: bf16[128,128], index: 1, kind: input, shape index: {}]
  %s2 = inlined_call_operand.hbm [shape: bf16[9,128,128], index: 2, kind: input, shape index: {}]
  %s3 = inlined_call_operand.hbm [shape: f32[10,1,128], index: 3, kind: input, shape index: {}]
  %s4 = inlined_call_operand.vmem [shape: f32[1,128], index: 4, kind: input, shape index: {}]
  %s5 = inlined_call_operand.<no memory space> [shape: f32[1,1], index: 5, kind: input, shape index: {}]
  %s6 = inlined_call_operand.vmem [shape: f32[16,1], index: 6, kind: output, shape index: {}]
  %s7 = sld [smem:[#allocation0]]
  $region50: #{tpu_custom_call.1} parent=0
    _
  %s9 = ssub.s32 1, %s7
  %s10 = scalar_select 0, %s9, %s7
  %v11 = vstv %s5
  %12 = vst [vmem:[#allocation2] sm:$0x1] %v11
  $region1: #{tpu_custom_call.1} parent=0
    #allocation3 [shape = 'u8[4096]{0}', space=vmem, size = 0x1000, scoped, tag = 'input window, operand 0, single buffered']
    #allocation4 [shape = 's32[1]{0}', space=sflag, size = 0x4, scoped, tag = 'scoped memory for tpu_custom_call.1']
    #allocation5 [shape = 'u8[32768]{0}', space=vmem, size = 0x8000, scoped, tag = 'input window, operand 1, single buffered']
    #allocation6 [shape = 's32[1]{0}', space=sflag, size = 0x4, scoped, tag = 'scoped memory for tpu_custom_call.1']
    #allocation7 [shape = 'u8[294912]{0}', space=vmem, size = 0x48000, scoped, tag = 'input window, operand 2, single buffered']
    #allocation8 [shape = 'u8[5120]{0}', space=vmem, size = 0x1400, scoped, tag = 'input window, operand 3, single buffered']
    #allocation9 [shape = 's32[1]{0}', space=sflag, size = 0x4, scoped, tag = 'scoped memory for tpu_custom_call.1']
    %13 = vsyncpa [#allocation4], 0
    %14 = vsyncpa [#allocation6], 0
    %15 = vsyncpa [#allocation9], 0
    // Predicated region
    $region2: #{tpu_custom_call.1} parent=1 // pred_check
      _
    $region3: #{tpu_custom_call.1} parent=1 // pred_check_branch
      %17 = sbr.rel (0) target = $region5
    $region4: #{tpu_custom_call.1} parent=1 // pred_region
      %s19 = ssub.s32 128, 128
      %20 = vsyncadd [#allocation4], %s19
      %s21 = sshll.u32 [#allocation3], 4
      %s22 = int_to_ptr.vmem [resolvable:$true] %s21
      %27 = dma.hbm_to_vmem [thread:$0]  %s0, 128, %s22, [#allocation4], 64, 64, 4
    $region5: #{tpu_custom_call.1} parent=1 // pred_fallthru
      _
    // Predicated region
    $region6: #{tpu_custom_call.1} parent=1 // pred_check
      _
    $region7: #{tpu_custom_call.1} parent=1 // pred_check_branch
      %29 = sbr.rel (0) target = $region9
    $region8: #{tpu_custom_call.1} parent=1 // pred_region
      %s31 = ssub.s32 1024, 1024
      %32 = vsyncadd [#allocation6], %s31
      %s33 = sshll.u32 [#allocation5], 4
      %s34 = int_to_ptr.vmem [resolvable:$true] %s33
      %39 = dma.hbm_to_vmem [thread:$0]  %s1, 1024, %s34, [#allocation6], 64, 64, 4
    $region9: #{tpu_custom_call.1} parent=1 // pred_fallthru
      _
    // Predicated region
    $region10: #{tpu_custom_call.1} parent=1 // pred_check
      _
    $region11: #{tpu_custom_call.1} parent=1 // pred_check_branch
      %41 = sbr.rel (0) target = $region13
    $region12: #{tpu_custom_call.1} parent=1 // pred_region
      %s43 = ssub.s32 9216, 9216
      %44 = vsyncadd [#allocation6], %s43
      %s45 = sshll.u32 [#allocation7], 4
      %s46 = int_to_ptr.vmem [resolvable:$true] %s45
      %51 = dma.hbm_to_vmem [thread:$0]  %s2, 9216, %s46, [#allocation6], 64, 64, 4
    $region13: #{tpu_custom_call.1} parent=1 // pred_fallthru
      _
    // Predicated region
    $region14: #{tpu_custom_call.1} parent=1 // pred_check
      _
    $region15: #{tpu_custom_call.1} parent=1 // pred_check_branch
      %53 = sbr.rel (0) target = $region17
    $region16: #{tpu_custom_call.1} parent=1 // pred_region
      %s55 = ssub.s32 160, 160
      %56 = vsyncadd [#allocation9], %s55
      %s57 = sshll.u32 [#allocation8], 4
      %s58 = int_to_ptr.vmem [resolvable:$true] %s57
      %63 = dma.hbm_to_vmem [thread:$0]  %s3, 160, %s58, [#allocation9], 16, 16, 1
    $region17: #{tpu_custom_call.1} parent=1 // pred_fallthru
      _
    // Predicated region
    $region18: #{tpu_custom_call.1} parent=1 // pred_check
      _
    $region19: #{tpu_custom_call.1} parent=1 // pred_check_branch
      %65 = sbr.rel (0) target = $region21
    $region20: #{tpu_custom_call.1} parent=1 // pred_region
      _
    $region21: #{tpu_custom_call.1} parent=1 // pred_fallthru
      _
    // Predicated region
    $region22: #{tpu_custom_call.1} parent=1 // pred_check
      _
    $region23: #{tpu_custom_call.1} parent=1 // pred_check_branch
      %67 = sbr.rel (0) target = $region25
    $region24: #{tpu_custom_call.1} parent=1 // pred_region
      _
    $region25: #{tpu_custom_call.1} parent=1 // pred_fallthru
      _
    // Predicated region
    $region26: #{tpu_custom_call.1} parent=1 // pred_check
      _
    $region27: #{tpu_custom_call.1} parent=1 // pred_check_branch
      %69 = sbr.rel (0) target = $region29
    $region28: #{tpu_custom_call.1} parent=1 // pred_region
      %70 = dma.done [#allocation4], 128
    $region29: #{tpu_custom_call.1} parent=1 // pred_fallthru
      _
    // Predicated region
    $region30: #{tpu_custom_call.1} parent=1 // pred_check
      _
    $region31: #{tpu_custom_call.1} parent=1 // pred_check_branch
      %72 = sbr.rel (0) target = $region33
    $region32: #{tpu_custom_call.1} parent=1 // pred_region
      %73 = dma.done [#allocation6], 1024
    $region33: #{tpu_custom_call.1} parent=1 // pred_fallthru
      _
    // Predicated region
    $region34: #{tpu_custom_call.1} parent=1 // pred_check
      _
    $region35: #{tpu_custom_call.1} parent=1 // pred_check_branch
      %75 = sbr.rel (0) target = $region37
    $region36: #{tpu_custom_call.1} parent=1 // pred_region
      %76 = dma.done [#allocation6], 9216
    $region37: #{tpu_custom_call.1} parent=1 // pred_fallthru
      _
    // Predicated region
    $region38: #{tpu_custom_call.1} parent=1 // pred_check
      _
    $region39: #{tpu_custom_call.1} parent=1 // pred_check_branch
      %78 = sbr.rel (0) target = $region41
    $region40: #{tpu_custom_call.1} parent=1 // pred_region
      %79 = dma.done [#allocation9], 160
    $region41: #{tpu_custom_call.1} parent=1 // pred_fallthru
      _
    %v81 = vld [vmem:[#allocation3] sm:$0xf]
    %v82 = vld [vmem:[#allocation3 + $0x4] sm:$0xf]
    %v83 = vld [vmem:[#allocation5] sm:$0xf]
    %v84 = vld [vmem:[#allocation5 + $0x4] sm:$0xf]
    %v85 = vld [vmem:[#allocation5 + $0x8] sm:$0xf]
    %v86 = vld [vmem:[#allocation5 + $0xc] sm:$0xf]
    %v87 = vld [vmem:[#allocation5 + $0x10] sm:$0xf]
    %v88 = vld [vmem:[#allocation5 + $0x14] sm:$0xf]
    %v89 = vld [vmem:[#allocation5 + $0x18] sm:$0xf]
    %v90 = vld [vmem:[#allocation5 + $0x1c] sm:$0xf]
    %v91 = vld [vmem:[#allocation5 + $0x20] sm:$0xf]
    %v92 = vld [vmem:[#allocation5 + $0x24] sm:$0xf]
    %v93 = vld [vmem:[#allocation5 + $0x28] sm:$0xf]
    %v94 = vld [vmem:[#allocation5 + $0x2c] sm:$0xf]
    %v95 = vld [vmem:[#allocation5 + $0x30] sm:$0xf]
    %v96 = vld [vmem:[#allocation5 + $0x34] sm:$0xf]
    %v97 = vld [vmem:[#allocation5 + $0x38] sm:$0xf]
    %v98 = vld [vmem:[#allocation5 + $0x3c] sm:$0xf]
    %v101 = vunpack.c.l.b16 %v81
    %v102 = vunpack.c.l.b16 %v82
    %v103 = vpack.c.b16 %v102, %v101
    %v121 = vunpack.c.l.b16 %v83
    %v122 = vunpack.c.l.b16 %v84
    %v123 = vunpack.c.l.b16 %v85
    %v124 = vunpack.c.l.b16 %v86
    %v125 = vunpack.c.l.b16 %v87
    %v126 = vunpack.c.l.b16 %v88
    %v127 = vunpack.c.l.b16 %v89
    %v128 = vunpack.c.l.b16 %v90
    %v129 = vunpack.c.l.b16 %v91
    %v130 = vunpack.c.l.b16 %v92
    %v131 = vunpack.c.l.b16 %v93
    %v132 = vunpack.c.l.b16 %v94
    %v133 = vunpack.c.l.b16 %v95
    %v134 = vunpack.c.l.b16 %v96
    %v135 = vunpack.c.l.b16 %v97
    %v136 = vunpack.c.l.b16 %v98
    %v137 = vpack.c.b16 %v122, %v121
    %v138 = vpack.c.b16 %v124, %v123
    %v139 = vpack.c.b16 %v126, %v125
    %v140 = vpack.c.b16 %v128, %v127
    %v141 = vpack.c.b16 %v130, %v129
    %v142 = vpack.c.b16 %v132, %v131
    %v143 = vpack.c.b16 %v134, %v133
    %v144 = vpack.c.b16 %v136, %v135
    %153 = vmatprep.subr.bf16.mxu0 0
    %154 = vmatpush1.bf16.msra.mxu0 %v144
    %155 = vmatprep.subr.bf16.mxu0 0
    %156 = vmatpush1.bf16.msra.mxu0 %v143
    %157 = vmatprep.subr.bf16.mxu0 0
    %158 = vmatpush1.bf16.msra.mxu0 %v142
    %159 = vmatprep.subr.bf16.mxu0 0
    %160 = vmatpush1.bf16.msra.mxu0 %v141
    %161 = vmatprep.subr.bf16.mxu0 0
    %162 = vmatpush1.bf16.msra.mxu0 %v140
    %163 = vmatprep.subr.bf16.mxu0 0
    %164 = vmatpush1.bf16.msra.mxu0 %v139
    %165 = vmatprep.subr.bf16.mxu0 0
    %166 = vmatpush1.bf16.msra.mxu0 %v138
    %167 = vmatprep.subr.bf16.mxu0 0
    %168 = vmatpush1.bf16.msra.mxu0 %v137
    %169 = vmatprep.subr.bf16.mxu0 0
    %170 = vmatpush2.bf16.msra.mxu0 0
    %171 = vmatprep.subr.bf16.mxu0 0
    %172 = vmatpush2.bf16.msra.mxu0 0
    %173 = vmatprep.subr.bf16.mxu0 0
    %174 = vmatpush2.bf16.msra.mxu0 0
    %175 = vmatprep.subr.bf16.mxu0 0
    %176 = vmatpush2.bf16.msra.mxu0 0
    %177 = vmatprep.subr.bf16.mxu0 0
    %178 = vmatpush2.bf16.msra.mxu0 0
    %179 = vmatprep.subr.bf16.mxu0 0
    %180 = vmatpush2.bf16.msra.mxu0 0
    %181 = vmatprep.subr.bf16.mxu0 0
    %182 = vmatpush2.bf16.msra.mxu0 0
    %183 = vmatprep.subr.bf16.mxu0 0
    %184 = vmatpush2.bf16.msra.mxu0 0
    %185 = vmatprep.mubr.bf16.mxu0 0
    %186 = vmatmul.mubr.bf16.gmra.mxu0 %v103
    %v187 = vpop.f32.mrf.mxu0
    %v188 = vadd.f32 0.0, %v187
    %v189 = vpop.f32.mrf.mxu0
    %v190 = vpop.f32.mrf.mxu0
    %v191 = vadd.f32 0.0, %v190
    %v192 = vpop.f32.mrf.mxu0
    %193 = vdwg.mxu0
    %v194 = vld [vmem:[#allocation8] sm:$0x1]
    %v195 = vpack.c.bf16 %v191, %v188
    %v196 = vpack.c.bf16 %v194, %v194
    %v198 = vpack.i.b16 %v196, %v196
    %v200 = vlaneseq
    %v201 = vshrl.u32 %v200, 7
    %v202 = vsub.s32 0, %v201
    %v203 = vrot.slane %v198, %v202
    %v204 = vadd.bf16 %v195, %v203
    %v205 = vmax.bf16 %v204, 0
    %v206 = vld [vmem:[#allocation7] sm:$0xf]
    %v207 = vld [vmem:[#allocation7 + $0x4] sm:$0xf]
    %v208 = vld [vmem:[#allocation7 + $0x8] sm:$0xf]
    %v209 = vld [vmem:[#allocation7 + $0xc] sm:$0xf]
    %v210 = vld [vmem:[#allocation7 + $0x10] sm:$0xf]
    %v211 = vld [vmem:[#allocation7 + $0x14] sm:$0xf]
    %v212 = vld [vmem:[#allocation7 + $0x18] sm:$0xf]
    %v213 = vld [vmem:[#allocation7 + $0x1c] sm:$0xf]
    %v214 = vld [vmem:[#allocation7 + $0x20] sm:$0xf]
    %v215 = vld [vmem:[#allocation7 + $0x24] sm:$0xf]
    %v216 = vld [vmem:[#allocation7 + $0x28] sm:$0xf]
    %v217 = vld [vmem:[#allocation7 + $0x2c] sm:$0xf]
    %v218 = vld [vmem:[#allocation7 + $0x30] sm:$0xf]
    %v219 = vld [vmem:[#allocation7 + $0x34] sm:$0xf]
    %v220 = vld [vmem:[#allocation7 + $0x38] sm:$0xf]
    %v221 = vld [vmem:[#allocation7 + $0x3c] sm:$0xf]
    %v238 = vunpack.c.l.b16 %v206
    %v239 = vunpack.c.l.b16 %v207
    %v240 = vunpack.c.l.b16 %v208
    %v241 = vunpack.c.l.b16 %v209
    %v242 = vunpack.c.l.b16 %v210
    %v243 = vunpack.c.l.b16 %v211
    %v244 = vunpack.c.l.b16 %v212
    %v245 = vunpack.c.l.b16 %v213
    %v246 = vunpack.c.l.b16 %v214
    %v247 = vunpack.c.l.b16 %v215
    %v248 = vunpack.c.l.b16 %v216
    %v249 = vunpack.c.l.b16 %v217
    %v250 = vunpack.c.l.b16 %v218
    %v251 = vunpack.c.l.b16 %v219
    %v252 = vunpack.c.l.b16 %v220
    %v253 = vunpack.c.l.b16 %v221
    %v254 = vpack.c.b16 %v239, %v238
    %v255 = vpack.c.b16 %v241, %v240
    %v256 = vpack.c.b16 %v243, %v242
    %v257 = vpack.c.b16 %v245, %v244
    %v258 = vpack.c.b16 %v247, %v246
    %v259 = vpack.c.b16 %v249, %v248
    %v260 = vpack.c.b16 %v251, %v250
    %v261 = vpack.c.b16 %v253, %v252
    %270 = vmatprep.subr.bf16.mxu0 0
    %271 = vmatpush1.bf16.msra.mxu0 %v261
    %272 = vmatprep.subr.bf16.mxu0 0
    %273 = vmatpush1.bf16.msra.mxu0 %v260
    %274 = vmatprep.subr.bf16.mxu0 0
    %275 = vmatpush1.bf16.msra.mxu0 %v259
    %276 = vmatprep.subr.bf16.mxu0 0
    %277 = vmatpush1.bf16.msra.mxu0 %v258
    %278 = vmatprep.subr.bf16.mxu0 0
    %279 = vmatpush1.bf16.msra.mxu0 %v257
    %280 = vmatprep.subr.bf16.mxu0 0
    %281 = vmatpush1.bf16.msra.mxu0 %v256
    %282 = vmatprep.subr.bf16.mxu0 0
    %283 = vmatpush1.bf16.msra.mxu0 %v255
    %284 = vmatprep.subr.bf16.mxu0 0
    %285 = vmatpush1.bf16.msra.mxu0 %v254
    %286 = vmatprep.subr.bf16.mxu0 0
    %287 = vmatpush2.bf16.msra.mxu0 0
    %288 = vmatprep.subr.bf16.mxu0 0
    %289 = vmatpush2.bf16.msra.mxu0 0
    %290 = vmatprep.subr.bf16.mxu0 0
    %291 = vmatpush2.bf16.msra.mxu0 0
    %292 = vmatprep.subr.bf16.mxu0 0
    %293 = vmatpush2.bf16.msra.mxu0 0
    %294 = vmatprep.subr.bf16.mxu0 0
    %295 = vmatpush2.bf16.msra.mxu0 0
    %296 = vmatprep.subr.bf16.mxu0 0
    %297 = vmatpush2.bf16.msra.mxu0 0
    %298 = vmatprep.subr.bf16.mxu0 0
    %299 = vmatpush2.bf16.msra.mxu0 0
    %300 = vmatprep.subr.bf16.mxu0 0
    %301 = vmatpush2.bf16.msra.mxu0 0
    %302 = vmatprep.mubr.bf16.mxu0 0
    %303 = vmatmul.mubr.bf16.gmra.mxu0 %v205
    %v304 = vpop.f32.mrf.mxu0
    %v305 = vadd.f32 0.0, %v304
    %v306 = vpop.f32.mrf.mxu0
    %v307 = vpop.f32.mrf.mxu0
    %v308 = vadd.f32 0.0, %v307
    %v309 = vpop.f32.mrf.mxu0
    %310 = vdwg.mxu0
    %s311 = scalar_lea.vmem [#allocation8], 1
    %v312 = vld [vmem:[%s311] sm:$0x1]
    %v313 = vpack.c.bf16 %v308, %v305
    %v314 = vpack.c.bf16 %v312, %v312
    %v316 = vpack.i.b16 %v314, %v314
    %v318 = vlaneseq
    %v319 = vshrl.u32 %v318, 7
    %v320 = vsub.s32 0, %v319
    %v321 = vrot.slane %v316, %v320
    %v322 = vadd.bf16 %v313, %v321
    %v323 = vmax.bf16 %v322, 0
    %s324 = scalar_lea.vmem [#allocation7], 64
    %v325 = vld [vmem:[%s324] sm:$0xf]
    %v326 = vld [vmem:[%s324 + $0x4] sm:$0xf]
    %v327 = vld [vmem:[%s324 + $0x8] sm:$0xf]
    %v328 = vld [vmem:[%s324 + $0xc] sm:$0xf]
    %v329 = vld [vmem:[%s324 + $0x10] sm:$0xf]
    %v330 = vld [vmem:[%s324 + $0x14] sm:$0xf]
    %v331 = vld [vmem:[%s324 + $0x18] sm:$0xf]
    %v332 = vld [vmem:[%s324 + $0x1c] sm:$0xf]
    %v333 = vld [vmem:[%s324 + $0x20] sm:$0xf]
    %v334 = vld [vmem:[%s324 + $0x24] sm:$0xf]
    %v335 = vld [vmem:[%s324 + $0x28] sm:$0xf]
    %v336 = vld [vmem:[%s324 + $0x2c] sm:$0xf]
    %v337 = vld [vmem:[%s324 + $0x30] sm:$0xf]
    %v338 = vld [vmem:[%s324 + $0x34] sm:$0xf]
    %v339 = vld [vmem:[%s324 + $0x38] sm:$0xf]
    %v340 = vld [vmem:[%s324 + $0x3c] sm:$0xf]
    %v357 = vunpack.c.l.b16 %v325
    %v358 = vunpack.c.l.b16 %v326
    %v359 = vunpack.c.l.b16 %v327
    %v360 = vunpack.c.l.b16 %v328
    %v361 = vunpack.c.l.b16 %v329
    %v362 = vunpack.c.l.b16 %v330
    %v363 = vunpack.c.l.b16 %v331
    %v364 = vunpack.c.l.b16 %v332
    %v365 = vunpack.c.l.b16 %v333
    %v366 = vunpack.c.l.b16 %v334
    %v367 = vunpack.c.l.b16 %v335
    %v368 = vunpack.c.l.b16 %v336
    %v369 = vunpack.c.l.b16 %v337
    %v370 = vunpack.c.l.b16 %v338
    %v371 = vunpack.c.l.b16 %v339
    %v372 = vunpack.c.l.b16 %v340
    %v373 = vpack.c.b16 %v358, %v357
    %v374 = vpack.c.b16 %v360, %v359
    %v375 = vpack.c.b16 %v362, %v361
    %v376 = vpack.c.b16 %v364, %v363
    %v377 = vpack.c.b16 %v366, %v365
    %v378 = vpack.c.b16 %v368, %v367
    %v379 = vpack.c.b16 %v370, %v369
    %v380 = vpack.c.b16 %v372, %v371
    %389 = vmatprep.subr.bf16.mxu0 0
    %390 = vmatpush1.bf16.msra.mxu0 %v380
    %391 = vmatprep.subr.bf16.mxu0 0
    %392 = vmatpush1.bf16.msra.mxu0 %v379
    %393 = vmatprep.subr.bf16.mxu0 0
    %394 = vmatpush1.bf16.msra.mxu0 %v378
    %395 = vmatprep.subr.bf16.mxu0 0
    %396 = vmatpush1.bf16.msra.mxu0 %v377
    %397 = vmatprep.subr.bf16.mxu0 0
    %398 = vmatpush1.bf16.msra.mxu0 %v376
    %399 = vmatprep.subr.bf16.mxu0 0
    %400 = vmatpush1.bf16.msra.mxu0 %v375
    %401 = vmatprep.subr.bf16.mxu0 0
    %402 = vmatpush1.bf16.msra.mxu0 %v374
    %403 = vmatprep.subr.bf16.mxu0 0
    %404 = vmatpush1.bf16.msra.mxu0 %v373
    %405 = vmatprep.subr.bf16.mxu0 0
    %406 = vmatpush2.bf16.msra.mxu0 0
    %407 = vmatprep.subr.bf16.mxu0 0
    %408 = vmatpush2.bf16.msra.mxu0 0
    %409 = vmatprep.subr.bf16.mxu0 0
    %410 = vmatpush2.bf16.msra.mxu0 0
    %411 = vmatprep.subr.bf16.mxu0 0
    %412 = vmatpush2.bf16.msra.mxu0 0
    %413 = vmatprep.subr.bf16.mxu0 0
    %414 = vmatpush2.bf16.msra.mxu0 0
    %415 = vmatprep.subr.bf16.mxu0 0
    %416 = vmatpush2.bf16.msra.mxu0 0
    %417 = vmatprep.subr.bf16.mxu0 0
    %418 = vmatpush2.bf16.msra.mxu0 0
    %419 = vmatprep.subr.bf16.mxu0 0
    %420 = vmatpush2.bf16.msra.mxu0 0
    %421 = vmatprep.mubr.bf16.mxu0 0
    %422 = vmatmul.mubr.bf16.gmra.mxu0 %v323
    %v423 = vpop.f32.mrf.mxu0
    %v424 = vadd.f32 0.0, %v423
    %v425 = vpop.f32.mrf.mxu0
    %v426 = vpop.f32.mrf.mxu0
    %v427 = vadd.f32 0.0, %v426
    %v428 = vpop.f32.mrf.mxu0
    %429 = vdwg.mxu0
    %s430 = scalar_lea.vmem [#allocation8], 2
    %v431 = vld [vmem:[%s430] sm:$0x1]
    %v432 = vpack.c.bf16 %v427, %v424
    %v433 = vpack.c.bf16 %v431, %v431
    %v435 = vpack.i.b16 %v433, %v433
    %v437 = vlaneseq
    %v438 = vshrl.u32 %v437, 7
    %v439 = vsub.s32 0, %v438
    %v440 = vrot.slane %v435, %v439
    %v441 = vadd.bf16 %v432, %v440
    %v442 = vmax.bf16 %v441, 0
    %s443 = scalar_lea.vmem [#allocation7], 128
    %v444 = vld [vmem:[%s443] sm:$0xf]
    %v445 = vld [vmem:[%s443 + $0x4] sm:$0xf]
    %v446 = vld [vmem:[%s443 + $0x8] sm:$0xf]
    %v447 = vld [vmem:[%s443 + $0xc] sm:$0xf]
    %v448 = vld [vmem:[%s443 + $0x10] sm:$0xf]
    %v449 = vld [vmem:[%s443 + $0x14] sm:$0xf]
    %v450 = vld [vmem:[%s443 + $0x18] sm:$0xf]
    %v451 = vld [vmem:[%s443 + $0x1c] sm:$0xf]
    %v452 = vld [vmem:[%s443 + $0x20] sm:$0xf]
    %v453 = vld [vmem:[%s443 + $0x24] sm:$0xf]
    %v454 = vld [vmem:[%s443 + $0x28] sm:$0xf]
    %v455 = vld [vmem:[%s443 + $0x2c] sm:$0xf]
    %v456 = vld [vmem:[%s443 + $0x30] sm:$0xf]
    %v457 = vld [vmem:[%s443 + $0x34] sm:$0xf]
    %v458 = vld [vmem:[%s443 + $0x38] sm:$0xf]
    %v459 = vld [vmem:[%s443 + $0x3c] sm:$0xf]
    %v476 = vunpack.c.l.b16 %v444
    %v477 = vunpack.c.l.b16 %v445
    %v478 = vunpack.c.l.b16 %v446
    %v479 = vunpack.c.l.b16 %v447
    %v480 = vunpack.c.l.b16 %v448
    %v481 = vunpack.c.l.b16 %v449
    %v482 = vunpack.c.l.b16 %v450
    %v483 = vunpack.c.l.b16 %v451
    %v484 = vunpack.c.l.b16 %v452
    %v485 = vunpack.c.l.b16 %v453
    %v486 = vunpack.c.l.b16 %v454
    %v487 = vunpack.c.l.b16 %v455
    %v488 = vunpack.c.l.b16 %v456
    %v489 = vunpack.c.l.b16 %v457
    %v490 = vunpack.c.l.b16 %v458
    %v491 = vunpack.c.l.b16 %v459
    %v492 = vpack.c.b16 %v477, %v476
    %v493 = vpack.c.b16 %v479, %v478
    %v494 = vpack.c.b16 %v481, %v480
    %v495 = vpack.c.b16 %v483, %v482
    %v496 = vpack.c.b16 %v485, %v484
    %v497 = vpack.c.b16 %v487, %v486
    %v498 = vpack.c.b16 %v489, %v488
    %v499 = vpack.c.b16 %v491, %v490
    %508 = vmatprep.subr.bf16.mxu0 0
    %509 = vmatpush1.bf16.msra.mxu0 %v499
    %510 = vmatprep.subr.bf16.mxu0 0
    %511 = vmatpush1.bf16.msra.mxu0 %v498
    %512 = vmatprep.subr.bf16.mxu0 0
    %513 = vmatpush1.bf16.msra.mxu0 %v497
    %514 = vmatprep.subr.bf16.mxu0 0
    %515 = vmatpush1.bf16.msra.mxu0 %v496
    %516 = vmatprep.subr.bf16.mxu0 0
    %517 = vmatpush1.bf16.msra.mxu0 %v495
    %518 = vmatprep.subr.bf16.mxu0 0
    %519 = vmatpush1.bf16.msra.mxu0 %v494
    %520 = vmatprep.subr.bf16.mxu0 0
    %521 = vmatpush1.bf16.msra.mxu0 %v493
    %522 = vmatprep.subr.bf16.mxu0 0
    %523 = vmatpush1.bf16.msra.mxu0 %v492
    %524 = vmatprep.subr.bf16.mxu0 0
    %525 = vmatpush2.bf16.msra.mxu0 0
    %526 = vmatprep.subr.bf16.mxu0 0
    %527 = vmatpush2.bf16.msra.mxu0 0
    %528 = vmatprep.subr.bf16.mxu0 0
    %529 = vmatpush2.bf16.msra.mxu0 0
    %530 = vmatprep.subr.bf16.mxu0 0
    %531 = vmatpush2.bf16.msra.mxu0 0
    %532 = vmatprep.subr.bf16.mxu0 0
    %533 = vmatpush2.bf16.msra.mxu0 0
    %534 = vmatprep.subr.bf16.mxu0 0
    %535 = vmatpush2.bf16.msra.mxu0 0
    %536 = vmatprep.subr.bf16.mxu0 0
    %537 = vmatpush2.bf16.msra.mxu0 0
    %538 = vmatprep.subr.bf16.mxu0 0
    %539 = vmatpush2.bf16.msra.mxu0 0
    %540 = vmatprep.mubr.bf16.mxu0 0
    %541 = vmatmul.mubr.bf16.gmra.mxu0 %v442
    %v542 = vpop.f32.mrf.mxu0
    %v543 = vadd.f32 0.0, %v542
    %v544 = vpop.f32.mrf.mxu0
    %v545 = vpop.f32.mrf.mxu0
    %v546 = vadd.f32 0.0, %v545
    %v547 = vpop.f32.mrf.mxu0
    %548 = vdwg.mxu0
    %s549 = scalar_lea.vmem [#allocation8], 3
    %v550 = vld [vmem:[%s549] sm:$0x1]
    %v551 = vpack.c.bf16 %v546, %v543
    %v552 = vpack.c.bf16 %v550, %v550
    %v554 = vpack.i.b16 %v552, %v552
    %v556 = vlaneseq
    %v557 = vshrl.u32 %v556, 7
    %v558 = vsub.s32 0, %v557
    %v559 = vrot.slane %v554, %v558
    %v560 = vadd.bf16 %v551, %v559
    %v561 = vmax.bf16 %v560, 0
    %s562 = scalar_lea.vmem [#allocation7], 192
    %v563 = vld [vmem:[%s562] sm:$0xf]
    %v564 = vld [vmem:[%s562 + $0x4] sm:$0xf]
    %v565 = vld [vmem:[%s562 + $0x8] sm:$0xf]
    %v566 = vld [vmem:[%s562 + $0xc] sm:$0xf]
    %v567 = vld [vmem:[%s562 + $0x10] sm:$0xf]
    %v568 = vld [vmem:[%s562 + $0x14] sm:$0xf]
    %v569 = vld [vmem:[%s562 + $0x18] sm:$0xf]
    %v570 = vld [vmem:[%s562 + $0x1c] sm:$0xf]
    %v571 = vld [vmem:[%s562 + $0x20] sm:$0xf]
    %v572 = vld [vmem:[%s562 + $0x24] sm:$0xf]
    %v573 = vld [vmem:[%s562 + $0x28] sm:$0xf]
    %v574 = vld [vmem:[%s562 + $0x2c] sm:$0xf]
    %v575 = vld [vmem:[%s562 + $0x30] sm:$0xf]
    %v576 = vld [vmem:[%s562 + $0x34] sm:$0xf]
    %v577 = vld [vmem:[%s562 + $0x38] sm:$0xf]
    %v578 = vld [vmem:[%s562 + $0x3c] sm:$0xf]
    %v595 = vunpack.c.l.b16 %v563
    %v596 = vunpack.c.l.b16 %v564
    %v597 = vunpack.c.l.b16 %v565
    %v598 = vunpack.c.l.b16 %v566
    %v599 = vunpack.c.l.b16 %v567
    %v600 = vunpack.c.l.b16 %v568
    %v601 = vunpack.c.l.b16 %v569
    %v602 = vunpack.c.l.b16 %v570
    %v603 = vunpack.c.l.b16 %v571
    %v604 = vunpack.c.l.b16 %v572
    %v605 = vunpack.c.l.b16 %v573
    %v606 = vunpack.c.l.b16 %v574
    %v607 = vunpack.c.l.b16 %v575
    %v608 = vunpack.c.l.b16 %v576
    %v609 = vunpack.c.l.b16 %v577
    %v610 = vunpack.c.l.b16 %v578
    %v611 = vpack.c.b16 %v596, %v595
    %v612 = vpack.c.b16 %v598, %v597
    %v613 = vpack.c.b16 %v600, %v599
    %v614 = vpack.c.b16 %v602, %v601
    %v615 = vpack.c.b16 %v604, %v603
    %v616 = vpack.c.b16 %v606, %v605
    %v617 = vpack.c.b16 %v608, %v607
    %v618 = vpack.c.b16 %v610, %v609
    %627 = vmatprep.subr.bf16.mxu0 0
    %628 = vmatpush1.bf16.msra.mxu0 %v618
    %629 = vmatprep.subr.bf16.mxu0 0
    %630 = vmatpush1.bf16.msra.mxu0 %v617
    %631 = vmatprep.subr.bf16.mxu0 0
    %632 = vmatpush1.bf16.msra.mxu0 %v616
    %633 = vmatprep.subr.bf16.mxu0 0
    %634 = vmatpush1.bf16.msra.mxu0 %v615
    %635 = vmatprep.subr.bf16.mxu0 0
    %636 = vmatpush1.bf16.msra.mxu0 %v614
    %637 = vmatprep.subr.bf16.mxu0 0
    %638 = vmatpush1.bf16.msra.mxu0 %v613
    %639 = vmatprep.subr.bf16.mxu0 0
    %640 = vmatpush1.bf16.msra.mxu0 %v612
    %641 = vmatprep.subr.bf16.mxu0 0
    %642 = vmatpush1.bf16.msra.mxu0 %v611
    %643 = vmatprep.subr.bf16.mxu0 0
    %644 = vmatpush2.bf16.msra.mxu0 0
    %645 = vmatprep.subr.bf16.mxu0 0
    %646 = vmatpush2.bf16.msra.mxu0 0
    %647 = vmatprep.subr.bf16.mxu0 0
    %648 = vmatpush2.bf16.msra.mxu0 0
    %649 = vmatprep.subr.bf16.mxu0 0
    %650 = vmatpush2.bf16.msra.mxu0 0
    %651 = vmatprep.subr.bf16.mxu0 0
    %652 = vmatpush2.bf16.msra.mxu0 0
    %653 = vmatprep.subr.bf16.mxu0 0
    %654 = vmatpush2.bf16.msra.mxu0 0
    %655 = vmatprep.subr.bf16.mxu0 0
    %656 = vmatpush2.bf16.msra.mxu0 0
    %657 = vmatprep.subr.bf16.mxu0 0
    %658 = vmatpush2.bf16.msra.mxu0 0
    %659 = vmatprep.mubr.bf16.mxu0 0
    %660 = vmatmul.mubr.bf16.gmra.mxu0 %v561
    %v661 = vpop.f32.mrf.mxu0
    %v662 = vadd.f32 0.0, %v661
    %v663 = vpop.f32.mrf.mxu0
    %v664 = vpop.f32.mrf.mxu0
    %v665 = vadd.f32 0.0, %v664
    %v666 = vpop.f32.mrf.mxu0
    %667 = vdwg.mxu0
    %s668 = scalar_lea.vmem [#allocation8], 4
    %v669 = vld [vmem:[%s668] sm:$0x1]
    %v670 = vpack.c.bf16 %v665, %v662
    %v671 = vpack.c.bf16 %v669, %v669
    %v673 = vpack.i.b16 %v671, %v671
    %v675 = vlaneseq
    %v676 = vshrl.u32 %v675, 7
    %v677 = vsub.s32 0, %v676
    %v678 = vrot.slane %v673, %v677
    %v679 = vadd.bf16 %v670, %v678
    %v680 = vmax.bf16 %v679, 0
    %s681 = scalar_lea.vmem [#allocation7], 256
    %v682 = vld [vmem:[%s681] sm:$0xf]
    %v683 = vld [vmem:[%s681 + $0x4] sm:$0xf]
    %v684 = vld [vmem:[%s681 + $0x8] sm:$0xf]
    %v685 = vld [vmem:[%s681 + $0xc] sm:$0xf]
    %v686 = vld [vmem:[%s681 + $0x10] sm:$0xf]
    %v687 = vld [vmem:[%s681 + $0x14] sm:$0xf]
    %v688 = vld [vmem:[%s681 + $0x18] sm:$0xf]
    %v689 = vld [vmem:[%s681 + $0x1c] sm:$0xf]
    %v690 = vld [vmem:[%s681 + $0x20] sm:$0xf]
    %v691 = vld [vmem:[%s681 + $0x24] sm:$0xf]
    %v692 = vld [vmem:[%s681 + $0x28] sm:$0xf]
    %v693 = vld [vmem:[%s681 + $0x2c] sm:$0xf]
    %v694 = vld [vmem:[%s681 + $0x30] sm:$0xf]
    %v695 = vld [vmem:[%s681 + $0x34] sm:$0xf]
    %v696 = vld [vmem:[%s681 + $0x38] sm:$0xf]
    %v697 = vld [vmem:[%s681 + $0x3c] sm:$0xf]
    %v714 = vunpack.c.l.b16 %v682
    %v715 = vunpack.c.l.b16 %v683
    %v716 = vunpack.c.l.b16 %v684
    %v717 = vunpack.c.l.b16 %v685
    %v718 = vunpack.c.l.b16 %v686
    %v719 = vunpack.c.l.b16 %v687
    %v720 = vunpack.c.l.b16 %v688
    %v721 = vunpack.c.l.b16 %v689
    %v722 = vunpack.c.l.b16 %v690
    %v723 = vunpack.c.l.b16 %v691
    %v724 = vunpack.c.l.b16 %v692
    %v725 = vunpack.c.l.b16 %v693
    %v726 = vunpack.c.l.b16 %v694
    %v727 = vunpack.c.l.b16 %v695
    %v728 = vunpack.c.l.b16 %v696
    %v729 = vunpack.c.l.b16 %v697
    %v730 = vpack.c.b16 %v715, %v714
    %v731 = vpack.c.b16 %v717, %v716
    %v732 = vpack.c.b16 %v719, %v718
    %v733 = vpack.c.b16 %v721, %v720
    %v734 = vpack.c.b16 %v723, %v722
    %v735 = vpack.c.b16 %v725, %v724
    %v736 = vpack.c.b16 %v727, %v726
    %v737 = vpack.c.b16 %v729, %v728
    %746 = vmatprep.subr.bf16.mxu0 0
    %747 = vmatpush1.bf16.msra.mxu0 %v737
    %748 = vmatprep.subr.bf16.mxu0 0
    %749 = vmatpush1.bf16.msra.mxu0 %v736
    %750 = vmatprep.subr.bf16.mxu0 0
    %751 = vmatpush1.bf16.msra.mxu0 %v735
    %752 = vmatprep.subr.bf16.mxu0 0
    %753 = vmatpush1.bf16.msra.mxu0 %v734
    %754 = vmatprep.subr.bf16.mxu0 0
    %755 = vmatpush1.bf16.msra.mxu0 %v733
    %756 = vmatprep.subr.bf16.mxu0 0
    %757 = vmatpush1.bf16.msra.mxu0 %v732
    %758 = vmatprep.subr.bf16.mxu0 0
    %759 = vmatpush1.bf16.msra.mxu0 %v731
    %760 = vmatprep.subr.bf16.mxu0 0
    %761 = vmatpush1.bf16.msra.mxu0 %v730
    %762 = vmatprep.subr.bf16.mxu0 0
    %763 = vmatpush2.bf16.msra.mxu0 0
    %764 = vmatprep.subr.bf16.mxu0 0
    %765 = vmatpush2.bf16.msra.mxu0 0
    %766 = vmatprep.subr.bf16.mxu0 0
    %767 = vmatpush2.bf16.msra.mxu0 0
    %768 = vmatprep.subr.bf16.mxu0 0
    %769 = vmatpush2.bf16.msra.mxu0 0
    %770 = vmatprep.subr.bf16.mxu0 0
    %771 = vmatpush2.bf16.msra.mxu0 0
    %772 = vmatprep.subr.bf16.mxu0 0
    %773 = vmatpush2.bf16.msra.mxu0 0
    %774 = vmatprep.subr.bf16.mxu0 0
    %775 = vmatpush2.bf16.msra.mxu0 0
    %776 = vmatprep.subr.bf16.mxu0 0
    %777 = vmatpush2.bf16.msra.mxu0 0
    %778 = vmatprep.mubr.bf16.mxu0 0
    %779 = vmatmul.mubr.bf16.gmra.mxu0 %v680
    %v780 = vpop.f32.mrf.mxu0
    %v781 = vadd.f32 0.0, %v780
    %v782 = vpop.f32.mrf.mxu0
    %v783 = vpop.f32.mrf.mxu0
    %v784 = vadd.f32 0.0, %v783
    %v785 = vpop.f32.mrf.mxu0
    %786 = vdwg.mxu0
    %s787 = scalar_lea.vmem [#allocation8], 5
    %v788 = vld [vmem:[%s787] sm:$0x1]
    %v789 = vpack.c.bf16 %v784, %v781
    %v790 = vpack.c.bf16 %v788, %v788
    %v792 = vpack.i.b16 %v790, %v790
    %v794 = vlaneseq
    %v795 = vshrl.u32 %v794, 7
    %v796 = vsub.s32 0, %v795
    %v797 = vrot.slane %v792, %v796
    %v798 = vadd.bf16 %v789, %v797
    %v799 = vmax.bf16 %v798, 0
    %s800 = scalar_lea.vmem [#allocation7], 320
    %v801 = vld [vmem:[%s800] sm:$0xf]
    %v802 = vld [vmem:[%s800 + $0x4] sm:$0xf]
    %v803 = vld [vmem:[%s800 + $0x8] sm:$0xf]
    %v804 = vld [vmem:[%s800 + $0xc] sm:$0xf]
    %v805 = vld [vmem:[%s800 + $0x10] sm:$0xf]
    %v806 = vld [vmem:[%s800 + $0x14] sm:$0xf]
    %v807 = vld [vmem:[%s800 + $0x18] sm:$0xf]
    %v808 = vld [vmem:[%s800 + $0x1c] sm:$0xf]
    %v809 = vld [vmem:[%s800 + $0x20] sm:$0xf]
    %v810 = vld [vmem:[%s800 + $0x24] sm:$0xf]
    %v811 = vld [vmem:[%s800 + $0x28] sm:$0xf]
    %v812 = vld [vmem:[%s800 + $0x2c] sm:$0xf]
    %v813 = vld [vmem:[%s800 + $0x30] sm:$0xf]
    %v814 = vld [vmem:[%s800 + $0x34] sm:$0xf]
    %v815 = vld [vmem:[%s800 + $0x38] sm:$0xf]
    %v816 = vld [vmem:[%s800 + $0x3c] sm:$0xf]
    %v833 = vunpack.c.l.b16 %v801
    %v834 = vunpack.c.l.b16 %v802
    %v835 = vunpack.c.l.b16 %v803
    %v836 = vunpack.c.l.b16 %v804
    %v837 = vunpack.c.l.b16 %v805
    %v838 = vunpack.c.l.b16 %v806
    %v839 = vunpack.c.l.b16 %v807
    %v840 = vunpack.c.l.b16 %v808
    %v841 = vunpack.c.l.b16 %v809
    %v842 = vunpack.c.l.b16 %v810
    %v843 = vunpack.c.l.b16 %v811
    %v844 = vunpack.c.l.b16 %v812
    %v845 = vunpack.c.l.b16 %v813
    %v846 = vunpack.c.l.b16 %v814
    %v847 = vunpack.c.l.b16 %v815
    %v848 = vunpack.c.l.b16 %v816
    %v849 = vpack.c.b16 %v834, %v833
    %v850 = vpack.c.b16 %v836, %v835
    %v851 = vpack.c.b16 %v838, %v837
    %v852 = vpack.c.b16 %v840, %v839
    %v853 = vpack.c.b16 %v842, %v841
    %v854 = vpack.c.b16 %v844, %v843
    %v855 = vpack.c.b16 %v846, %v845
    %v856 = vpack.c.b16 %v848, %v847
    %865 = vmatprep.subr.bf16.mxu0 0
    %866 = vmatpush1.bf16.msra.mxu0 %v856
    %867 = vmatprep.subr.bf16.mxu0 0
    %868 = vmatpush1.bf16.msra.mxu0 %v855
    %869 = vmatprep.subr.bf16.mxu0 0
    %870 = vmatpush1.bf16.msra.mxu0 %v854
    %871 = vmatprep.subr.bf16.mxu0 0
    %872 = vmatpush1.bf16.msra.mxu0 %v853
    %873 = vmatprep.subr.bf16.mxu0 0
    %874 = vmatpush1.bf16.msra.mxu0 %v852
    %875 = vmatprep.subr.bf16.mxu0 0
    %876 = vmatpush1.bf16.msra.mxu0 %v851
    %877 = vmatprep.subr.bf16.mxu0 0
    %878 = vmatpush1.bf16.msra.mxu0 %v850
    %879 = vmatprep.subr.bf16.mxu0 0
    %880 = vmatpush1.bf16.msra.mxu0 %v849
    %881 = vmatprep.subr.bf16.mxu0 0
    %882 = vmatpush2.bf16.msra.mxu0 0
    %883 = vmatprep.subr.bf16.mxu0 0
    %884 = vmatpush2.bf16.msra.mxu0 0
    %885 = vmatprep.subr.bf16.mxu0 0
    %886 = vmatpush2.bf16.msra.mxu0 0
    %887 = vmatprep.subr.bf16.mxu0 0
    %888 = vmatpush2.bf16.msra.mxu0 0
    %889 = vmatprep.subr.bf16.mxu0 0
    %890 = vmatpush2.bf16.msra.mxu0 0
    %891 = vmatprep.subr.bf16.mxu0 0
    %892 = vmatpush2.bf16.msra.mxu0 0
    %893 = vmatprep.subr.bf16.mxu0 0
    %894 = vmatpush2.bf16.msra.mxu0 0
    %895 = vmatprep.subr.bf16.mxu0 0
    %896 = vmatpush2.bf16.msra.mxu0 0
    %897 = vmatprep.mubr.bf16.mxu0 0
    %898 = vmatmul.mubr.bf16.gmra.mxu0 %v799
    %v899 = vpop.f32.mrf.mxu0
    %v900 = vadd.f32 0.0, %v899
    %v901 = vpop.f32.mrf.mxu0
    %v902 = vpop.f32.mrf.mxu0
    %v903 = vadd.f32 0.0, %v902
    %v904 = vpop.f32.mrf.mxu0
    %905 = vdwg.mxu0
    %s906 = scalar_lea.vmem [#allocation8], 6
    %v907 = vld [vmem:[%s906] sm:$0x1]
    %v908 = vpack.c.bf16 %v903, %v900
    %v909 = vpack.c.bf16 %v907, %v907
    %v911 = vpack.i.b16 %v909, %v909
    %v913 = vlaneseq
    %v914 = vshrl.u32 %v913, 7
    %v915 = vsub.s32 0, %v914
    %v916 = vrot.slane %v911, %v915
    %v917 = vadd.bf16 %v908, %v916
    %v918 = vmax.bf16 %v917, 0
    %s919 = scalar_lea.vmem [#allocation7], 384
    %v920 = vld [vmem:[%s919] sm:$0xf]
    %v921 = vld [vmem:[%s919 + $0x4] sm:$0xf]
    %v922 = vld [vmem:[%s919 + $0x8] sm:$0xf]
    %v923 = vld [vmem:[%s919 + $0xc] sm:$0xf]
    %v924 = vld [vmem:[%s919 + $0x10] sm:$0xf]
    %v925 = vld [vmem:[%s919 + $0x14] sm:$0xf]
    %v926 = vld [vmem:[%s919 + $0x18] sm:$0xf]
    %v927 = vld [vmem:[%s919 + $0x1c] sm:$0xf]
    %v928 = vld [vmem:[%s919 + $0x20] sm:$0xf]
    %v929 = vld [vmem:[%s919 + $0x24] sm:$0xf]
    %v930 = vld [vmem:[%s919 + $0x28] sm:$0xf]
    %v931 = vld [vmem:[%s919 + $0x2c] sm:$0xf]
    %v932 = vld [vmem:[%s919 + $0x30] sm:$0xf]
    %v933 = vld [vmem:[%s919 + $0x34] sm:$0xf]
    %v934 = vld [vmem:[%s919 + $0x38] sm:$0xf]
    %v935 = vld [vmem:[%s919 + $0x3c] sm:$0xf]
    %v952 = vunpack.c.l.b16 %v920
    %v953 = vunpack.c.l.b16 %v921
    %v954 = vunpack.c.l.b16 %v922
    %v955 = vunpack.c.l.b16 %v923
    %v956 = vunpack.c.l.b16 %v924
    %v957 = vunpack.c.l.b16 %v925
    %v958 = vunpack.c.l.b16 %v926
    %v959 = vunpack.c.l.b16 %v927
    %v960 = vunpack.c.l.b16 %v928
    %v961 = vunpack.c.l.b16 %v929
    %v962 = vunpack.c.l.b16 %v930
    %v963 = vunpack.c.l.b16 %v931
    %v964 = vunpack.c.l.b16 %v932
    %v965 = vunpack.c.l.b16 %v933
    %v966 = vunpack.c.l.b16 %v934
    %v967 = vunpack.c.l.b16 %v935
    %v968 = vpack.c.b16 %v953, %v952
    %v969 = vpack.c.b16 %v955, %v954
    %v970 = vpack.c.b16 %v957, %v956
    %v971 = vpack.c.b16 %v959, %v958
    %v972 = vpack.c.b16 %v961, %v960
    %v973 = vpack.c.b16 %v963, %v962
    %v974 = vpack.c.b16 %v965, %v964
    %v975 = vpack.c.b16 %v967, %v966
    %984 = vmatprep.subr.bf16.mxu0 0
    %985 = vmatpush1.bf16.msra.mxu0 %v975
    %986 = vmatprep.subr.bf16.mxu0 0
    %987 = vmatpush1.bf16.msra.mxu0 %v974
    %988 = vmatprep.subr.bf16.mxu0 0
    %989 = vmatpush1.bf16.msra.mxu0 %v973
    %990 = vmatprep.subr.bf16.mxu0 0
    %991 = vmatpush1.bf16.msra.mxu0 %v972
    %992 = vmatprep.subr.bf16.mxu0 0
    %993 = vmatpush1.bf16.msra.mxu0 %v971
    %994 = vmatprep.subr.bf16.mxu0 0
    %995 = vmatpush1.bf16.msra.mxu0 %v970
    %996 = vmatprep.subr.bf16.mxu0 0
    %997 = vmatpush1.bf16.msra.mxu0 %v969
    %998 = vmatprep.subr.bf16.mxu0 0
    %999 = vmatpush1.bf16.msra.mxu0 %v968
    %1000 = vmatprep.subr.bf16.mxu0 0
    %1001 = vmatpush2.bf16.msra.mxu0 0
    %1002 = vmatprep.subr.bf16.mxu0 0
    %1003 = vmatpush2.bf16.msra.mxu0 0
    %1004 = vmatprep.subr.bf16.mxu0 0
    %1005 = vmatpush2.bf16.msra.mxu0 0
    %1006 = vmatprep.subr.bf16.mxu0 0
    %1007 = vmatpush2.bf16.msra.mxu0 0
    %1008 = vmatprep.subr.bf16.mxu0 0
    %1009 = vmatpush2.bf16.msra.mxu0 0
    %1010 = vmatprep.subr.bf16.mxu0 0
    %1011 = vmatpush2.bf16.msra.mxu0 0
    %1012 = vmatprep.subr.bf16.mxu0 0
    %1013 = vmatpush2.bf16.msra.mxu0 0
    %1014 = vmatprep.subr.bf16.mxu0 0
    %1015 = vmatpush2.bf16.msra.mxu0 0
    %1016 = vmatprep.mubr.bf16.mxu0 0
    %1017 = vmatmul.mubr.bf16.gmra.mxu0 %v918
    %v1018 = vpop.f32.mrf.mxu0
    %v1019 = vadd.f32 0.0, %v1018
    %v1020 = vpop.f32.mrf.mxu0
    %v1021 = vpop.f32.mrf.mxu0
    %v1022 = vadd.f32 0.0, %v1021
    %v1023 = vpop.f32.mrf.mxu0
    %1024 = vdwg.mxu0
    %s1025 = scalar_lea.vmem [#allocation8], 7
    %v1026 = vld [vmem:[%s1025] sm:$0x1]
    %v1027 = vpack.c.bf16 %v1022, %v1019
    %v1028 = vpack.c.bf16 %v1026, %v1026
    %v1030 = vpack.i.b16 %v1028, %v1028
    %v1032 = vlaneseq
    %v1033 = vshrl.u32 %v1032, 7
    %v1034 = vsub.s32 0, %v1033
    %v1035 = vrot.slane %v1030, %v1034
    %v1036 = vadd.bf16 %v1027, %v1035
    %v1037 = vmax.bf16 %v1036, 0
    %s1038 = scalar_lea.vmem [#allocation7], 448
    %v1039 = vld [vmem:[%s1038] sm:$0xf]
    %v1040 = vld [vmem:[%s1038 + $0x4] sm:$0xf]
    %v1041 = vld [vmem:[%s1038 + $0x8] sm:$0xf]
    %v1042 = vld [vmem:[%s1038 + $0xc] sm:$0xf]
    %v1043 = vld [vmem:[%s1038 + $0x10] sm:$0xf]
    %v1044 = vld [vmem:[%s1038 + $0x14] sm:$0xf]
    %v1045 = vld [vmem:[%s1038 + $0x18] sm:$0xf]
    %v1046 = vld [vmem:[%s1038 + $0x1c] sm:$0xf]
    %v1047 = vld [vmem:[%s1038 + $0x20] sm:$0xf]
    %v1048 = vld [vmem:[%s1038 + $0x24] sm:$0xf]
    %v1049 = vld [vmem:[%s1038 + $0x28] sm:$0xf]
    %v1050 = vld [vmem:[%s1038 + $0x2c] sm:$0xf]
    %v1051 = vld [vmem:[%s1038 + $0x30] sm:$0xf]
    %v1052 = vld [vmem:[%s1038 + $0x34] sm:$0xf]
    %v1053 = vld [vmem:[%s1038 + $0x38] sm:$0xf]
    %v1054 = vld [vmem:[%s1038 + $0x3c] sm:$0xf]
    %v1071 = vunpack.c.l.b16 %v1039
    %v1072 = vunpack.c.l.b16 %v1040
    %v1073 = vunpack.c.l.b16 %v1041
    %v1074 = vunpack.c.l.b16 %v1042
    %v1075 = vunpack.c.l.b16 %v1043
    %v1076 = vunpack.c.l.b16 %v1044
    %v1077 = vunpack.c.l.b16 %v1045
    %v1078 = vunpack.c.l.b16 %v1046
    %v1079 = vunpack.c.l.b16 %v1047
    %v1080 = vunpack.c.l.b16 %v1048
    %v1081 = vunpack.c.l.b16 %v1049
    %v1082 = vunpack.c.l.b16 %v1050
    %v1083 = vunpack.c.l.b16 %v1051
    %v1084 = vunpack.c.l.b16 %v1052
    %v1085 = vunpack.c.l.b16 %v1053
    %v1086 = vunpack.c.l.b16 %v1054
    %v1087 = vpack.c.b16 %v1072, %v1071
    %v1088 = vpack.c.b16 %v1074, %v1073
    %v1089 = vpack.c.b16 %v1076, %v1075
    %v1090 = vpack.c.b16 %v1078, %v1077
    %v1091 = vpack.c.b16 %v1080, %v1079
    %v1092 = vpack.c.b16 %v1082, %v1081
    %v1093 = vpack.c.b16 %v1084, %v1083
    %v1094 = vpack.c.b16 %v1086, %v1085
    %1103 = vmatprep.subr.bf16.mxu0 0
    %1104 = vmatpush1.bf16.msra.mxu0 %v1094
    %1105 = vmatprep.subr.bf16.mxu0 0
    %1106 = vmatpush1.bf16.msra.mxu0 %v1093
    %1107 = vmatprep.subr.bf16.mxu0 0
    %1108 = vmatpush1.bf16.msra.mxu0 %v1092
    %1109 = vmatprep.subr.bf16.mxu0 0
    %1110 = vmatpush1.bf16.msra.mxu0 %v1091
    %1111 = vmatprep.subr.bf16.mxu0 0
    %1112 = vmatpush1.bf16.msra.mxu0 %v1090
    %1113 = vmatprep.subr.bf16.mxu0 0
    %1114 = vmatpush1.bf16.msra.mxu0 %v1089
    %1115 = vmatprep.subr.bf16.mxu0 0
    %1116 = vmatpush1.bf16.msra.mxu0 %v1088
    %1117 = vmatprep.subr.bf16.mxu0 0
    %1118 = vmatpush1.bf16.msra.mxu0 %v1087
    %1119 = vmatprep.subr.bf16.mxu0 0
    %1120 = vmatpush2.bf16.msra.mxu0 0
    %1121 = vmatprep.subr.bf16.mxu0 0
    %1122 = vmatpush2.bf16.msra.mxu0 0
    %1123 = vmatprep.subr.bf16.mxu0 0
    %1124 = vmatpush2.bf16.msra.mxu0 0
    %1125 = vmatprep.subr.bf16.mxu0 0
    %1126 = vmatpush2.bf16.msra.mxu0 0
    %1127 = vmatprep.subr.bf16.mxu0 0
    %1128 = vmatpush2.bf16.msra.mxu0 0
    %1129 = vmatprep.subr.bf16.mxu0 0
    %1130 = vmatpush2.bf16.msra.mxu0 0
    %1131 = vmatprep.subr.bf16.mxu0 0
    %1132 = vmatpush2.bf16.msra.mxu0 0
    %1133 = vmatprep.subr.bf16.mxu0 0
    %1134 = vmatpush2.bf16.msra.mxu0 0
    %1135 = vmatprep.mubr.bf16.mxu0 0
    %1136 = vmatmul.mubr.bf16.gmra.mxu0 %v1037
    %v1137 = vpop.f32.mrf.mxu0
    %v1138 = vadd.f32 0.0, %v1137
    %v1139 = vpop.f32.mrf.mxu0
    %v1140 = vpop.f32.mrf.mxu0
    %v1141 = vadd.f32 0.0, %v1140
    %v1142 = vpop.f32.mrf.mxu0
    %1143 = vdwg.mxu0
    %s1144 = scalar_lea.vmem [#allocation8], 8
    %v1145 = vld [vmem:[%s1144] sm:$0x1]
    %v1146 = vpack.c.bf16 %v1141, %v1138
    %v1147 = vpack.c.bf16 %v1145, %v1145
    %v1149 = vpack.i.b16 %v1147, %v1147
    %v1151 = vlaneseq
    %v1152 = vshrl.u32 %v1151, 7
    %v1153 = vsub.s32 0, %v1152
    %v1154 = vrot.slane %v1149, %v1153
    %v1155 = vadd.bf16 %v1146, %v1154
    %v1156 = vmax.bf16 %v1155, 0
    %s1157 = scalar_lea.vmem [#allocation7], 512
    %v1158 = vld [vmem:[%s1157] sm:$0xf]
    %v1159 = vld [vmem:[%s1157 + $0x4] sm:$0xf]
    %v1160 = vld [vmem:[%s1157 + $0x8] sm:$0xf]
    %v1161 = vld [vmem:[%s1157 + $0xc] sm:$0xf]
    %v1162 = vld [vmem:[%s1157 + $0x10] sm:$0xf]
    %v1163 = vld [vmem:[%s1157 + $0x14] sm:$0xf]
    %v1164 = vld [vmem:[%s1157 + $0x18] sm:$0xf]
    %v1165 = vld [vmem:[%s1157 + $0x1c] sm:$0xf]
    %v1166 = vld [vmem:[%s1157 + $0x20] sm:$0xf]
    %v1167 = vld [vmem:[%s1157 + $0x24] sm:$0xf]
    %v1168 = vld [vmem:[%s1157 + $0x28] sm:$0xf]
    %v1169 = vld [vmem:[%s1157 + $0x2c] sm:$0xf]
    %v1170 = vld [vmem:[%s1157 + $0x30] sm:$0xf]
    %v1171 = vld [vmem:[%s1157 + $0x34] sm:$0xf]
    %v1172 = vld [vmem:[%s1157 + $0x38] sm:$0xf]
    %v1173 = vld [vmem:[%s1157 + $0x3c] sm:$0xf]
    %s1174 = scalar_lea.vmem [#allocation8], 9
    %v1175 = vld [vmem:[%s1174] sm:$0x1]
    %v1177 = vlaneseq
    %v1178 = vshrl.u32 %v1177, 7
    %v1179 = vsub.s32 0, %v1178
    %v1180 = vrot.slane %v1175, %v1179
    %v1198 = vunpack.c.l.b16 %v1158
    %v1199 = vunpack.c.l.b16 %v1159
    %v1200 = vunpack.c.l.b16 %v1160
    %v1201 = vunpack.c.l.b16 %v1161
    %v1202 = vunpack.c.l.b16 %v1162
    %v1203 = vunpack.c.l.b16 %v1163
    %v1204 = vunpack.c.l.b16 %v1164
    %v1205 = vunpack.c.l.b16 %v1165
    %v1206 = vunpack.c.l.b16 %v1166
    %v1207 = vunpack.c.l.b16 %v1167
    %v1208 = vunpack.c.l.b16 %v1168
    %v1209 = vunpack.c.l.b16 %v1169
    %v1210 = vunpack.c.l.b16 %v1170
    %v1211 = vunpack.c.l.b16 %v1171
    %v1212 = vunpack.c.l.b16 %v1172
    %v1213 = vunpack.c.l.b16 %v1173
    %v1214 = vpack.c.b16 %v1199, %v1198
    %v1215 = vpack.c.b16 %v1201, %v1200
    %v1216 = vpack.c.b16 %v1203, %v1202
    %v1217 = vpack.c.b16 %v1205, %v1204
    %v1218 = vpack.c.b16 %v1207, %v1206
    %v1219 = vpack.c.b16 %v1209, %v1208
    %v1220 = vpack.c.b16 %v1211, %v1210
    %v1221 = vpack.c.b16 %v1213, %v1212
    %1230 = vmatprep.subr.bf16.mxu0 0
    %1231 = vmatpush1.bf16.msra.mxu0 %v1221
    %1232 = vmatprep.subr.bf16.mxu0 0
    %1233 = vmatpush1.bf16.msra.mxu0 %v1220
    %1234 = vmatprep.subr.bf16.mxu0 0
    %1235 = vmatpush1.bf16.msra.mxu0 %v1219
    %1236 = vmatprep.subr.bf16.mxu0 0
    %1237 = vmatpush1.bf16.msra.mxu0 %v1218
    %1238 = vmatprep.subr.bf16.mxu0 0
    %1239 = vmatpush1.bf16.msra.mxu0 %v1217
    %1240 = vmatprep.subr.bf16.mxu0 0
    %1241 = vmatpush1.bf16.msra.mxu0 %v1216
    %1242 = vmatprep.subr.bf16.mxu0 0
    %1243 = vmatpush1.bf16.msra.mxu0 %v1215
    %1244 = vmatprep.subr.bf16.mxu0 0
    %1245 = vmatpush1.bf16.msra.mxu0 %v1214
    %1246 = vmatprep.subr.bf16.mxu0 0
    %1247 = vmatpush2.bf16.msra.mxu0 0
    %1248 = vmatprep.subr.bf16.mxu0 0
    %1249 = vmatpush2.bf16.msra.mxu0 0
    %1250 = vmatprep.subr.bf16.mxu0 0
    %1251 = vmatpush2.bf16.msra.mxu0 0
    %1252 = vmatprep.subr.bf16.mxu0 0
    %1253 = vmatpush2.bf16.msra.mxu0 0
    %1254 = vmatprep.subr.bf16.mxu0 0
    %1255 = vmatpush2.bf16.msra.mxu0 0
    %1256 = vmatprep.subr.bf16.mxu0 0
    %1257 = vmatpush2.bf16.msra.mxu0 0
    %1258 = vmatprep.subr.bf16.mxu0 0
    %1259 = vmatpush2.bf16.msra.mxu0 0
    %1260 = vmatprep.subr.bf16.mxu0 0
    %1261 = vmatpush2.bf16.msra.mxu0 0
    %1262 = vmatprep.mubr.bf16.mxu0 0
    %1263 = vmatmul.mubr.bf16.gmra.mxu0 %v1156
    %v1264 = vpop.f32.mrf.mxu0
    %v1265 = vadd.f32 %v1180, %v1264
    %v1266 = vpop.f32.mrf.mxu0
    %v1267 = vpop.f32.mrf.mxu0
    %v1268 = vadd.f32 %v1180, %v1267
    %v1269 = vpop.f32.mrf.mxu0
    %1270 = vdwg.mxu0
    %v1271 = vmax.f32 %v1265, 0.0
    %v1272 = vmax.f32 %v1268, 0.0
    %v1273 = vld [vmem:[%s4] sm:$0x1]
    %v1275 = vlaneseq
    %v1276 = vshrl.u32 %v1275, 7
    %v1277 = vsub.s32 0, %v1276
    %v1278 = vrot.slane %v1273, %v1277
    %v1280 = vmul.f32 %v1271, %v1278
    %v1281 = vmul.f32 %v1272, %v1278
    %1282 = vadd.xlane.f32.xlu0 %v1280
    %v1283 = vpop.xlane.xlu0 %1282
    %1284 = vadd.xlane.f32.xlu0 %v1281
    %v1285 = vpop.xlane.xlu0 %1284
    %v1286 = vld [vmem:[#allocation2] sm:$0x1]
    %v1288 = vlaneseq
    %v1289 = vshrl.u32 %v1288, 7
    %v1290 = vsub.s32 0, %v1289
    %v1291 = vrot.slane %v1286, %v1290
    %v1293 = vadd.f32 %v1283, %v1291
    %v1294 = vadd.f32 %v1285, %v1291
    %vm1295 = vcmask 7168
    %1296 = vst.msk [vmem:[%s6] sm:$0xff] %vm1295, %v1293
    %1297 = vst.msk [vmem:[%s6 + $0x8] sm:$0xff] %vm1295, %v1294
    // Predicated region
    $region42: #{tpu_custom_call.1} parent=1 // pred_check
      _
    $region43: #{tpu_custom_call.1} parent=1 // pred_check_branch
      %1299 = sbr.rel (0) target = $region45
    $region44: #{tpu_custom_call.1} parent=1 // pred_region
      _
    $region45: #{tpu_custom_call.1} parent=1 // pred_fallthru
      _
    // Predicated region
    $region46: #{tpu_custom_call.1} parent=1 // pred_check
      _
    $region47: #{tpu_custom_call.1} parent=1 // pred_check_branch
      %1301 = sbr.rel (0) target = $region49
    $region48: #{tpu_custom_call.1} parent=1 // pred_region
      _
    $region49: #{tpu_custom_call.1} parent=1 // pred_fallthru
      _
    %1302 = vsyncpa [#allocation4], 1
    %1303 = vsyncpa [#allocation6], 1
    %1304 = vsyncpa [#allocation9], 1

// kernel: tpu_custom_call.1
$region0: #{tpu_custom_call.1}
  #allocation0 [shape = 'u32[]', space=smem, size = 0x4, offset = 0x4, fixed_abs, tag = 'smem constant byte address 0x4 - core index']
  #allocation1 [shape = 'u32[144,128]{1,0:T(1,128)}', space=vmem, size = 0x12000, scoped, tag = 'internal scratch']
  #allocation2 [shape = 'f32[1,1]{1,0:T(1,128)S(1)}', space=vmem, size = 0x200, scoped, tag = 'scoped memory for tpu_custom_call.1']
  %s0 = inlined_call_operand.hbm [shape: bf16[16,128], index: 0, kind: input, shape index: {}]
  %s1 = inlined_call_operand.hbm [shape: bf16[128,128], index: 1, kind: input, shape index: {}]
  %s2 = inlined_call_operand.hbm [shape: bf16[9,128,128], index: 2, kind: input, shape index: {}]
  %s3 = inlined_call_operand.hbm [shape: f32[10,1,128], index: 3, kind: input, shape index: {}]
  %s4 = inlined_call_operand.vmem [shape: f32[1,128], index: 4, kind: input, shape index: {}]
  %s5 = inlined_call_operand.<no memory space> [shape: f32[1,1], index: 5, kind: input, shape index: {}]
  %s6 = inlined_call_operand.vmem [shape: f32[16,1], index: 6, kind: output, shape index: {}]
  %s7 = sld [smem:[#allocation0]]
  $region50: #{tpu_custom_call.1} parent=0
    _
  %s9 = ssub.s32 1, %s7
  %s10 = scalar_select 0, %s9, %s7
  %v11 = vstv %s5
  %12 = vst [vmem:[#allocation2] sm:$0x1] %v11
  $region1: #{tpu_custom_call.1} parent=0
    #allocation3 [shape = 'u8[4096]{0}', space=vmem, size = 0x1000, scoped, tag = 'input window, operand 0, single buffered']
    #allocation4 [shape = 's32[1]{0}', space=sflag, size = 0x4, scoped, tag = 'scoped memory for tpu_custom_call.1']
    #allocation5 [shape = 'u8[32768]{0}', space=vmem, size = 0x8000, scoped, tag = 'input window, operand 1, single buffered']
    #allocation6 [shape = 's32[1]{0}', space=sflag, size = 0x4, scoped, tag = 'scoped memory for tpu_custom_call.1']
    #allocation7 [shape = 'u8[294912]{0}', space=vmem, size = 0x48000, scoped, tag = 'input window, operand 2, single buffered']
    #allocation8 [shape = 'u8[5120]{0}', space=vmem, size = 0x1400, scoped, tag = 'input window, operand 3, single buffered']
    #allocation9 [shape = 's32[1]{0}', space=sflag, size = 0x4, scoped, tag = 'scoped memory for tpu_custom_call.1']
    %13 = vsyncpa [#allocation4], 0
    %14 = vsyncpa [#allocation6], 0
    %15 = vsyncpa [#allocation9], 0
    // Predicated region
    $region2: #{tpu_custom_call.1} parent=1 // pred_check
      _
    $region3: #{tpu_custom_call.1} parent=1 // pred_check_branch
      %17 = sbr.rel (0) target = $region5
    $region4: #{tpu_custom_call.1} parent=1 // pred_region
      %s19 = ssub.s32 128, 128
      %20 = vsyncadd [#allocation4], %s19
      %s21 = sshll.u32 [#allocation3], 4
      %s22 = int_to_ptr.vmem [resolvable:$true] %s21
      %27 = dma.hbm_to_vmem [thread:$0]  %s0, 128, %s22, [#allocation4], 64, 64, 4
    $region5: #{tpu_custom_call.1} parent=1 // pred_fallthru
      _
    // Predicated region
    $region6: #{tpu_custom_call.1} parent=1 // pred_check
      _
    $region7: #{tpu_custom_call.1} parent=1 // pred_check_branch
      %29 = sbr.rel (0) target = $region9
    $region8: #{tpu_custom_call.1} parent=1 // pred_region
      %s31 = ssub.s32 1024, 1024
      %32 = vsyncadd [#allocation6], %s31
      %s33 = sshll.u32 [#allocation5], 4
      %s34 = int_to_ptr.vmem [resolvable:$true] %s33
      %39 = dma.hbm_to_vmem [thread:$0]  %s1, 1024, %s34, [#allocation6], 64, 64, 4
    $region9: #{tpu_custom_call.1} parent=1 // pred_fallthru
      _
    // Predicated region
    $region10: #{tpu_custom_call.1} parent=1 // pred_check
      _
    $region11: #{tpu_custom_call.1} parent=1 // pred_check_branch
      %41 = sbr.rel (0) target = $region13
    $region12: #{tpu_custom_call.1} parent=1 // pred_region
      %s43 = ssub.s32 9216, 9216
      %44 = vsyncadd [#allocation6], %s43
      %s45 = sshll.u32 [#allocation7], 4
      %s46 = int_to_ptr.vmem [resolvable:$true] %s45
      %51 = dma.hbm_to_vmem [thread:$0]  %s2, 9216, %s46, [#allocation6], 64, 64, 4
    $region13: #{tpu_custom_call.1} parent=1 // pred_fallthru
      _
    // Predicated region
    $region14: #{tpu_custom_call.1} parent=1 // pred_check
      _
    $region15: #{tpu_custom_call.1} parent=1 // pred_check_branch
      %53 = sbr.rel (0) target = $region17
    $region16: #{tpu_custom_call.1} parent=1 // pred_region
      %s55 = ssub.s32 160, 160
      %56 = vsyncadd [#allocation9], %s55
      %s57 = sshll.u32 [#allocation8], 4
      %s58 = int_to_ptr.vmem [resolvable:$true] %s57
      %63 = dma.hbm_to_vmem [thread:$0]  %s3, 160, %s58, [#allocation9], 16, 16, 1
    $region17: #{tpu_custom_call.1} parent=1 // pred_fallthru
      _
    // Predicated region
    $region18: #{tpu_custom_call.1} parent=1 // pred_check
      _
    $region19: #{tpu_custom_call.1} parent=1 // pred_check_branch
      %65 = sbr.rel (0) target = $region21
    $region20: #{tpu_custom_call.1} parent=1 // pred_region
      _
    $region21: #{tpu_custom_call.1} parent=1 // pred_fallthru
      _
    // Predicated region
    $region22: #{tpu_custom_call.1} parent=1 // pred_check
      _
    $region23: #{tpu_custom_call.1} parent=1 // pred_check_branch
      %67 = sbr.rel (0) target = $region25
    $region24: #{tpu_custom_call.1} parent=1 // pred_region
      _
    $region25: #{tpu_custom_call.1} parent=1 // pred_fallthru
      _
    // Predicated region
    $region26: #{tpu_custom_call.1} parent=1 // pred_check
      _
    $region27: #{tpu_custom_call.1} parent=1 // pred_check_branch
      %69 = sbr.rel (0) target = $region29
    $region28: #{tpu_custom_call.1} parent=1 // pred_region
      %70 = dma.done [#allocation4], 128
    $region29: #{tpu_custom_call.1} parent=1 // pred_fallthru
      _
    // Predicated region
    $region30: #{tpu_custom_call.1} parent=1 // pred_check
      _
    $region31: #{tpu_custom_call.1} parent=1 // pred_check_branch
      %72 = sbr.rel (0) target = $region33
    $region32: #{tpu_custom_call.1} parent=1 // pred_region
      %73 = dma.done [#allocation6], 1024
    $region33: #{tpu_custom_call.1} parent=1 // pred_fallthru
      _
    // Predicated region
    $region34: #{tpu_custom_call.1} parent=1 // pred_check
      _
    $region35: #{tpu_custom_call.1} parent=1 // pred_check_branch
      %75 = sbr.rel (0) target = $region37
    $region36: #{tpu_custom_call.1} parent=1 // pred_region
      %76 = dma.done [#allocation6], 9216
    $region37: #{tpu_custom_call.1} parent=1 // pred_fallthru
      _
    // Predicated region
    $region38: #{tpu_custom_call.1} parent=1 // pred_check
      _
    $region39: #{tpu_custom_call.1} parent=1 // pred_check_branch
      %78 = sbr.rel (0) target = $region41
    $region40: #{tpu_custom_call.1} parent=1 // pred_region
      %79 = dma.done [#allocation9], 160
    $region41: #{tpu_custom_call.1} parent=1 // pred_fallthru
      _
    %v81 = vld [vmem:[#allocation3] sm:$0xf]
    %v82 = vld [vmem:[#allocation3 + $0x4] sm:$0xf]
    %v83 = vld [vmem:[#allocation5] sm:$0xf]
    %v84 = vld [vmem:[#allocation5 + $0x4] sm:$0xf]
    %v85 = vld [vmem:[#allocation5 + $0x8] sm:$0xf]
    %v86 = vld [vmem:[#allocation5 + $0xc] sm:$0xf]
    %v87 = vld [vmem:[#allocation5 + $0x10] sm:$0xf]
    %v88 = vld [vmem:[#allocation5 + $0x14] sm:$0xf]
    %v89 = vld [vmem:[#allocation5 + $0x18] sm:$0xf]
    %v90 = vld [vmem:[#allocation5 + $0x1c] sm:$0xf]
    %v91 = vld [vmem:[#allocation5 + $0x20] sm:$0xf]
    %v92 = vld [vmem:[#allocation5 + $0x24] sm:$0xf]
    %v93 = vld [vmem:[#allocation5 + $0x28] sm:$0xf]
    %v94 = vld [vmem:[#allocation5 + $0x2c] sm:$0xf]
    %v95 = vld [vmem:[#allocation5 + $0x30] sm:$0xf]
    %v96 = vld [vmem:[#allocation5 + $0x34] sm:$0xf]
    %v97 = vld [vmem:[#allocation5 + $0x38] sm:$0xf]
    %v98 = vld [vmem:[#allocation5 + $0x3c] sm:$0xf]
    %v101 = vunpack.c.l.b16 %v81
    %v102 = vunpack.c.l.b16 %v82
    %v103 = vpack.c.b16 %v102, %v101
    %v121 = vunpack.c.l.b16 %v83
    %v122 = vunpack.c.l.b16 %v84
    %v123 = vunpack.c.l.b16 %v85
    %v124 = vunpack.c.l.b16 %v86
    %v125 = vunpack.c.l.b16 %v87
    %v126 = vunpack.c.l.b16 %v88
    %v127 = vunpack.c.l.b16 %v89
    %v128 = vunpack.c.l.b16 %v90
    %v129 = vunpack.c.l.b16 %v91
    %v130 = vunpack.c.l.b16 %v92
    %v131 = vunpack.c.l.b16 %v93
    %v132 = vunpack.c.l.b16 %v94
    %v133 = vunpack.c.l.b16 %v95
    %v134 = vunpack.c.l.b16 %v96
    %v135 = vunpack.c.l.b16 %v97
    %v136 = vunpack.c.l.b16 %v98
    %v137 = vpack.c.b16 %v122, %v121
    %v138 = vpack.c.b16 %v124, %v123
    %v139 = vpack.c.b16 %v126, %v125
    %v140 = vpack.c.b16 %v128, %v127
    %v141 = vpack.c.b16 %v130, %v129
    %v142 = vpack.c.b16 %v132, %v131
    %v143 = vpack.c.b16 %v134, %v133
    %v144 = vpack.c.b16 %v136, %v135
    %153 = vmatprep.subr.bf16.mxu0 0
    %154 = vmatpush1.bf16.msra.mxu0 %v144
    %155 = vmatprep.subr.bf16.mxu0 0
    %156 = vmatpush1.bf16.msra.mxu0 %v143
    %157 = vmatprep.subr.bf16.mxu0 0
    %158 = vmatpush1.bf16.msra.mxu0 %v142
    %159 = vmatprep.subr.bf16.mxu0 0
    %160 = vmatpush1.bf16.msra.mxu0 %v141
    %161 = vmatprep.subr.bf16.mxu0 0
    %162 = vmatpush1.bf16.msra.mxu0 %v140
    %163 = vmatprep.subr.bf16.mxu0 0
    %164 = vmatpush1.bf16.msra.mxu0 %v139
    %165 = vmatprep.subr.bf16.mxu0 0
    %166 = vmatpush1.bf16.msra.mxu0 %v138
    %167 = vmatprep.subr.bf16.mxu0 0
    %168 = vmatpush1.bf16.msra.mxu0 %v137
    %169 = vmatprep.subr.bf16.mxu0 0
    %170 = vmatpush2.bf16.msra.mxu0 0
    %171 = vmatprep.subr.bf16.mxu0 0
    %172 = vmatpush2.bf16.msra.mxu0 0
    %173 = vmatprep.subr.bf16.mxu0 0
    %174 = vmatpush2.bf16.msra.mxu0 0
    %175 = vmatprep.subr.bf16.mxu0 0
    %176 = vmatpush2.bf16.msra.mxu0 0
    %177 = vmatprep.subr.bf16.mxu0 0
    %178 = vmatpush2.bf16.msra.mxu0 0
    %179 = vmatprep.subr.bf16.mxu0 0
    %180 = vmatpush2.bf16.msra.mxu0 0
    %181 = vmatprep.subr.bf16.mxu0 0
    %182 = vmatpush2.bf16.msra.mxu0 0
    %183 = vmatprep.subr.bf16.mxu0 0
    %184 = vmatpush2.bf16.msra.mxu0 0
    %185 = vmatprep.mubr.bf16.mxu0 0
    %186 = vmatmul.mubr.bf16.gmra.mxu0 %v103
    %v187 = vpop.f32.mrf.mxu0
    %v188 = vadd.f32 0.0, %v187
    %v189 = vpop.f32.mrf.mxu0
    %v190 = vpop.f32.mrf.mxu0
    %v191 = vadd.f32 0.0, %v190
    %v192 = vpop.f32.mrf.mxu0
    %193 = vdwg.mxu0
    %v194 = vld [vmem:[#allocation8] sm:$0x1]
    %v195 = vpack.c.bf16 %v191, %v188
    %v196 = vpack.c.bf16 %v194, %v194
    %v198 = vpack.i.b16 %v196, %v196
    %v200 = vlaneseq
    %v201 = vshrl.u32 %v200, 7
    %v202 = vsub.s32 0, %v201
    %v203 = vrot.slane %v198, %v202
    %v204 = vadd.bf16 %v195, %v203
    %v205 = vmax.bf16 %v204, 0
    %v206 = vld [vmem:[#allocation7] sm:$0xf]
    %v207 = vld [vmem:[#allocation7 + $0x4] sm:$0xf]
    %v208 = vld [vmem:[#allocation7 + $0x8] sm:$0xf]
    %v209 = vld [vmem:[#allocation7 + $0xc] sm:$0xf]
    %v210 = vld [vmem:[#allocation7 + $0x10] sm:$0xf]
    %v211 = vld [vmem:[#allocation7 + $0x14] sm:$0xf]
    %v212 = vld [vmem:[#allocation7 + $0x18] sm:$0xf]
    %v213 = vld [vmem:[#allocation7 + $0x1c] sm:$0xf]
    %v214 = vld [vmem:[#allocation7 + $0x20] sm:$0xf]
    %v215 = vld [vmem:[#allocation7 + $0x24] sm:$0xf]
    %v216 = vld [vmem:[#allocation7 + $0x28] sm:$0xf]
    %v217 = vld [vmem:[#allocation7 + $0x2c] sm:$0xf]
    %v218 = vld [vmem:[#allocation7 + $0x30] sm:$0xf]
    %v219 = vld [vmem:[#allocation7 + $0x34] sm:$0xf]
    %v220 = vld [vmem:[#allocation7 + $0x38] sm:$0xf]
    %v221 = vld [vmem:[#allocation7 + $0x3c] sm:$0xf]
    %v238 = vunpack.c.l.b16 %v206
    %v239 = vunpack.c.l.b16 %v207
    %v240 = vunpack.c.l.b16 %v208
    %v241 = vunpack.c.l.b16 %v209
    %v242 = vunpack.c.l.b16 %v210
    %v243 = vunpack.c.l.b16 %v211
    %v244 = vunpack.c.l.b16 %v212
    %v245 = vunpack.c.l.b16 %v213
    %v246 = vunpack.c.l.b16 %v214
    %v247 = vunpack.c.l.b16 %v215
    %v248 = vunpack.c.l.b16 %v216
    %v249 = vunpack.c.l.b16 %v217
    %v250 = vunpack.c.l.b16 %v218
    %v251 = vunpack.c.l.b16 %v219
    %v252 = vunpack.c.l.b16 %v220
    %v253 = vunpack.c.l.b16 %v221
    %v254 = vpack.c.b16 %v239, %v238
    %v255 = vpack.c.b16 %v241, %v240
    %v256 = vpack.c.b16 %v243, %v242
    %v257 = vpack.c.b16 %v245, %v244
    %v258 = vpack.c.b16 %v247, %v246
    %v259 = vpack.c.b16 %v249, %v248
    %v260 = vpack.c.b16 %v251, %v250
    %v261 = vpack.c.b16 %v253, %v252
    %270 = vmatprep.subr.bf16.mxu0 0
    %271 = vmatpush1.bf16.msra.mxu0 %v261
    %272 = vmatprep.subr.bf16.mxu0 0
    %273 = vmatpush1.bf16.msra.mxu0 %v260
    %274 = vmatprep.subr.bf16.mxu0 0
    %275 = vmatpush1.bf16.msra.mxu0 %v259
    %276 = vmatprep.subr.bf16.mxu0 0
    %277 = vmatpush1.bf16.msra.mxu0 %v258
    %278 = vmatprep.subr.bf16.mxu0 0
    %279 = vmatpush1.bf16.msra.mxu0 %v257
    %280 = vmatprep.subr.bf16.mxu0 0
    %281 = vmatpush1.bf16.msra.mxu0 %v256
    %282 = vmatprep.subr.bf16.mxu0 0
    %283 = vmatpush1.bf16.msra.mxu0 %v255
    %284 = vmatprep.subr.bf16.mxu0 0
    %285 = vmatpush1.bf16.msra.mxu0 %v254
    %286 = vmatprep.subr.bf16.mxu0 0
    %287 = vmatpush2.bf16.msra.mxu0 0
    %288 = vmatprep.subr.bf16.mxu0 0
    %289 = vmatpush2.bf16.msra.mxu0 0
    %290 = vmatprep.subr.bf16.mxu0 0
    %291 = vmatpush2.bf16.msra.mxu0 0
    %292 = vmatprep.subr.bf16.mxu0 0
    %293 = vmatpush2.bf16.msra.mxu0 0
    %294 = vmatprep.subr.bf16.mxu0 0
    %295 = vmatpush2.bf16.msra.mxu0 0
    %296 = vmatprep.subr.bf16.mxu0 0
    %297 = vmatpush2.bf16.msra.mxu0 0
    %298 = vmatprep.subr.bf16.mxu0 0
    %299 = vmatpush2.bf16.msra.mxu0 0
    %300 = vmatprep.subr.bf16.mxu0 0
    %301 = vmatpush2.bf16.msra.mxu0 0
    %302 = vmatprep.mubr.bf16.mxu0 0
    %303 = vmatmul.mubr.bf16.gmra.mxu0 %v205
    %v304 = vpop.f32.mrf.mxu0
    %v305 = vadd.f32 0.0, %v304
    %v306 = vpop.f32.mrf.mxu0
    %v307 = vpop.f32.mrf.mxu0
    %v308 = vadd.f32 0.0, %v307
    %v309 = vpop.f32.mrf.mxu0
    %310 = vdwg.mxu0
    %s311 = scalar_lea.vmem [#allocation8], 1
    %v312 = vld [vmem:[%s311] sm:$0x1]
    %v313 = vpack.c.bf16 %v308, %v305
    %v314 = vpack.c.bf16 %v312, %v312
    %v316 = vpack.i.b16 %v314, %v314
    %v318 = vlaneseq
    %v319 = vshrl.u32 %v318, 7
    %v320 = vsub.s32 0, %v319
    %v321 = vrot.slane %v316, %v320
    %v322 = vadd.bf16 %v313, %v321
    %v323 = vmax.bf16 %v322, 0
    %s324 = scalar_lea.vmem [#allocation7], 64
    %v325 = vld [vmem:[%s324] sm:$0xf]
    %v326 = vld [vmem:[%s324 + $0x4] sm:$0xf]
    %v327 = vld [vmem:[%s324 + $0x8] sm:$0xf]
    %v328 = vld [vmem:[%s324 + $0xc] sm:$0xf]
    %v329 = vld [vmem:[%s324 + $0x10] sm:$0xf]
    %v330 = vld [vmem:[%s324 + $0x14] sm:$0xf]
    %v331 = vld [vmem:[%s324 + $0x18] sm:$0xf]
    %v332 = vld [vmem:[%s324 + $0x1c] sm:$0xf]
    %v333 = vld [vmem:[%s324 + $0x20] sm:$0xf]
    %v334 = vld [vmem:[%s324 + $0x24] sm:$0xf]
    %v335 = vld [vmem:[%s324 + $0x28] sm:$0xf]
    %v336 = vld [vmem:[%s324 + $0x2c] sm:$0xf]
    %v337 = vld [vmem:[%s324 + $0x30] sm:$0xf]
    %v338 = vld [vmem:[%s324 + $0x34] sm:$0xf]
    %v339 = vld [vmem:[%s324 + $0x38] sm:$0xf]
    %v340 = vld [vmem:[%s324 + $0x3c] sm:$0xf]
    %v357 = vunpack.c.l.b16 %v325
    %v358 = vunpack.c.l.b16 %v326
    %v359 = vunpack.c.l.b16 %v327
    %v360 = vunpack.c.l.b16 %v328
    %v361 = vunpack.c.l.b16 %v329
    %v362 = vunpack.c.l.b16 %v330
    %v363 = vunpack.c.l.b16 %v331
    %v364 = vunpack.c.l.b16 %v332
    %v365 = vunpack.c.l.b16 %v333
    %v366 = vunpack.c.l.b16 %v334
    %v367 = vunpack.c.l.b16 %v335
    %v368 = vunpack.c.l.b16 %v336
    %v369 = vunpack.c.l.b16 %v337
    %v370 = vunpack.c.l.b16 %v338
    %v371 = vunpack.c.l.b16 %v339
    %v372 = vunpack.c.l.b16 %v340
    %v373 = vpack.c.b16 %v358, %v357
    %v374 = vpack.c.b16 %v360, %v359
    %v375 = vpack.c.b16 %v362, %v361
    %v376 = vpack.c.b16 %v364, %v363
    %v377 = vpack.c.b16 %v366, %v365
    %v378 = vpack.c.b16 %v368, %v367
    %v379 = vpack.c.b16 %v370, %v369
    %v380 = vpack.c.b16 %v372, %v371
    %389 = vmatprep.subr.bf16.mxu0 0
    %390 = vmatpush1.bf16.msra.mxu0 %v380
    %391 = vmatprep.subr.bf16.mxu0 0
    %392 = vmatpush1.bf16.msra.mxu0 %v379
    %393 = vmatprep.subr.bf16.mxu0 0
    %394 = vmatpush1.bf16.msra.mxu0 %v378
    %395 = vmatprep.subr.bf16.mxu0 0
    %396 = vmatpush1.bf16.msra.mxu0 %v377
    %397 = vmatprep.subr.bf16.mxu0 0
    %398 = vmatpush1.bf16.msra.mxu0 %v376
    %399 = vmatprep.subr.bf16.mxu0 0
    %400 = vmatpush1.bf16.msra.mxu0 %v375
    %401 = vmatprep.subr.bf16.mxu0 0
    %402 = vmatpush1.bf16.msra.mxu0 %v374
    %403 = vmatprep.subr.bf16.mxu0 0
    %404 = vmatpush1.bf16.msra.mxu0 %v373
    %405 = vmatprep.subr.bf16.mxu0 0
    %406 = vmatpush2.bf16.msra.mxu0 0
    %407 = vmatprep.subr.bf16.mxu0 0
    %408 = vmatpush2.bf16.msra.mxu0 0
    %409 = vmatprep.subr.bf16.mxu0 0
    %410 = vmatpush2.bf16.msra.mxu0 0
    %411 = vmatprep.subr.bf16.mxu0 0
    %412 = vmatpush2.bf16.msra.mxu0 0
    %413 = vmatprep.subr.bf16.mxu0 0
    %414 = vmatpush2.bf16.msra.mxu0 0
    %415 = vmatprep.subr.bf16.mxu0 0
    %416 = vmatpush2.bf16.msra.mxu0 0
    %417 = vmatprep.subr.bf16.mxu0 0
    %418 = vmatpush2.bf16.msra.mxu0 0
    %419 = vmatprep.subr.bf16.mxu0 0
    %420 = vmatpush2.bf16.msra.mxu0 0
    %421 = vmatprep.mubr.bf16.mxu0 0
    %422 = vmatmul.mubr.bf16.gmra.mxu0 %v323
    %v423 = vpop.f32.mrf.mxu0
    %v424 = vadd.f32 0.0, %v423
    %v425 = vpop.f32.mrf.mxu0
    %v426 = vpop.f32.mrf.mxu0
    %v427 = vadd.f32 0.0, %v426
    %v428 = vpop.f32.mrf.mxu0
    %429 = vdwg.mxu0
    %s430 = scalar_lea.vmem [#allocation8], 2
    %v431 = vld [vmem:[%s430] sm:$0x1]
    %v432 = vpack.c.bf16 %v427, %v424
    %v433 = vpack.c.bf16 %v431, %v431
    %v435 = vpack.i.b16 %v433, %v433
    %v437 = vlaneseq
    %v438 = vshrl.u32 %v437, 7
    %v439 = vsub.s32 0, %v438
    %v440 = vrot.slane %v435, %v439
    %v441 = vadd.bf16 %v432, %v440
    %v442 = vmax.bf16 %v441, 0
    %s443 = scalar_lea.vmem [#allocation7], 128
    %v444 = vld [vmem:[%s443] sm:$0xf]
    %v445 = vld [vmem:[%s443 + $0x4] sm:$0xf]
    %v446 = vld [vmem:[%s443 + $0x8] sm:$0xf]
    %v447 = vld [vmem:[%s443 + $0xc] sm:$0xf]
    %v448 = vld [vmem:[%s443 + $0x10] sm:$0xf]
    %v449 = vld [vmem:[%s443 + $0x14] sm:$0xf]
    %v450 = vld [vmem:[%s443 + $0x18] sm:$0xf]
    %v451 = vld [vmem:[%s443 + $0x1c] sm:$0xf]
    %v452 = vld [vmem:[%s443 + $0x20] sm:$0xf]
    %v453 = vld [vmem:[%s443 + $0x24] sm:$0xf]
    %v454 = vld [vmem:[%s443 + $0x28] sm:$0xf]
    %v455 = vld [vmem:[%s443 + $0x2c] sm:$0xf]
    %v456 = vld [vmem:[%s443 + $0x30] sm:$0xf]
    %v457 = vld [vmem:[%s443 + $0x34] sm:$0xf]
    %v458 = vld [vmem:[%s443 + $0x38] sm:$0xf]
    %v459 = vld [vmem:[%s443 + $0x3c] sm:$0xf]
    %v476 = vunpack.c.l.b16 %v444
    %v477 = vunpack.c.l.b16 %v445
    %v478 = vunpack.c.l.b16 %v446
    %v479 = vunpack.c.l.b16 %v447
    %v480 = vunpack.c.l.b16 %v448
    %v481 = vunpack.c.l.b16 %v449
    %v482 = vunpack.c.l.b16 %v450
    %v483 = vunpack.c.l.b16 %v451
    %v484 = vunpack.c.l.b16 %v452
    %v485 = vunpack.c.l.b16 %v453
    %v486 = vunpack.c.l.b16 %v454
    %v487 = vunpack.c.l.b16 %v455
    %v488 = vunpack.c.l.b16 %v456
    %v489 = vunpack.c.l.b16 %v457
    %v490 = vunpack.c.l.b16 %v458
    %v491 = vunpack.c.l.b16 %v459
    %v492 = vpack.c.b16 %v477, %v476
    %v493 = vpack.c.b16 %v479, %v478
    %v494 = vpack.c.b16 %v481, %v480
    %v495 = vpack.c.b16 %v483, %v482
    %v496 = vpack.c.b16 %v485, %v484
    %v497 = vpack.c.b16 %v487, %v486
    %v498 = vpack.c.b16 %v489, %v488
    %v499 = vpack.c.b16 %v491, %v490
    %508 = vmatprep.subr.bf16.mxu0 0
    %509 = vmatpush1.bf16.msra.mxu0 %v499
    %510 = vmatprep.subr.bf16.mxu0 0
    %511 = vmatpush1.bf16.msra.mxu0 %v498
    %512 = vmatprep.subr.bf16.mxu0 0
    %513 = vmatpush1.bf16.msra.mxu0 %v497
    %514 = vmatprep.subr.bf16.mxu0 0
    %515 = vmatpush1.bf16.msra.mxu0 %v496
    %516 = vmatprep.subr.bf16.mxu0 0
    %517 = vmatpush1.bf16.msra.mxu0 %v495
    %518 = vmatprep.subr.bf16.mxu0 0
    %519 = vmatpush1.bf16.msra.mxu0 %v494
    %520 = vmatprep.subr.bf16.mxu0 0
    %521 = vmatpush1.bf16.msra.mxu0 %v493
    %522 = vmatprep.subr.bf16.mxu0 0
    %523 = vmatpush1.bf16.msra.mxu0 %v492
    %524 = vmatprep.subr.bf16.mxu0 0
    %525 = vmatpush2.bf16.msra.mxu0 0
    %526 = vmatprep.subr.bf16.mxu0 0
    %527 = vmatpush2.bf16.msra.mxu0 0
    %528 = vmatprep.subr.bf16.mxu0 0
    %529 = vmatpush2.bf16.msra.mxu0 0
    %530 = vmatprep.subr.bf16.mxu0 0
    %531 = vmatpush2.bf16.msra.mxu0 0
    %532 = vmatprep.subr.bf16.mxu0 0
    %533 = vmatpush2.bf16.msra.mxu0 0
    %534 = vmatprep.subr.bf16.mxu0 0
    %535 = vmatpush2.bf16.msra.mxu0 0
    %536 = vmatprep.subr.bf16.mxu0 0
    %537 = vmatpush2.bf16.msra.mxu0 0
    %538 = vmatprep.subr.bf16.mxu0 0
    %539 = vmatpush2.bf16.msra.mxu0 0
    %540 = vmatprep.mubr.bf16.mxu0 0
    %541 = vmatmul.mubr.bf16.gmra.mxu0 %v442
    %v542 = vpop.f32.mrf.mxu0
    %v543 = vadd.f32 0.0, %v542
    %v544 = vpop.f32.mrf.mxu0
    %v545 = vpop.f32.mrf.mxu0
    %v546 = vadd.f32 0.0, %v545
    %v547 = vpop.f32.mrf.mxu0
    %548 = vdwg.mxu0
    %s549 = scalar_lea.vmem [#allocation8], 3
    %v550 = vld [vmem:[%s549] sm:$0x1]
    %v551 = vpack.c.bf16 %v546, %v543
    %v552 = vpack.c.bf16 %v550, %v550
    %v554 = vpack.i.b16 %v552, %v552
    %v556 = vlaneseq
    %v557 = vshrl.u32 %v556, 7
    %v558 = vsub.s32 0, %v557
    %v559 = vrot.slane %v554, %v558
    %v560 = vadd.bf16 %v551, %v559
    %v561 = vmax.bf16 %v560, 0
    %s562 = scalar_lea.vmem [#allocation7], 192
    %v563 = vld [vmem:[%s562] sm:$0xf]
    %v564 = vld [vmem:[%s562 + $0x4] sm:$0xf]
    %v565 = vld [vmem:[%s562 + $0x8] sm:$0xf]
    %v566 = vld [vmem:[%s562 + $0xc] sm:$0xf]
    %v567 = vld [vmem:[%s562 + $0x10] sm:$0xf]
    %v568 = vld [vmem:[%s562 + $0x14] sm:$0xf]
    %v569 = vld [vmem:[%s562 + $0x18] sm:$0xf]
    %v570 = vld [vmem:[%s562 + $0x1c] sm:$0xf]
    %v571 = vld [vmem:[%s562 + $0x20] sm:$0xf]
    %v572 = vld [vmem:[%s562 + $0x24] sm:$0xf]
    %v573 = vld [vmem:[%s562 + $0x28] sm:$0xf]
    %v574 = vld [vmem:[%s562 + $0x2c] sm:$0xf]
    %v575 = vld [vmem:[%s562 + $0x30] sm:$0xf]
    %v576 = vld [vmem:[%s562 + $0x34] sm:$0xf]
    %v577 = vld [vmem:[%s562 + $0x38] sm:$0xf]
    %v578 = vld [vmem:[%s562 + $0x3c] sm:$0xf]
    %v595 = vunpack.c.l.b16 %v563
    %v596 = vunpack.c.l.b16 %v564
    %v597 = vunpack.c.l.b16 %v565
    %v598 = vunpack.c.l.b16 %v566
    %v599 = vunpack.c.l.b16 %v567
    %v600 = vunpack.c.l.b16 %v568
    %v601 = vunpack.c.l.b16 %v569
    %v602 = vunpack.c.l.b16 %v570
    %v603 = vunpack.c.l.b16 %v571
    %v604 = vunpack.c.l.b16 %v572
    %v605 = vunpack.c.l.b16 %v573
    %v606 = vunpack.c.l.b16 %v574
    %v607 = vunpack.c.l.b16 %v575
    %v608 = vunpack.c.l.b16 %v576
    %v609 = vunpack.c.l.b16 %v577
    %v610 = vunpack.c.l.b16 %v578
    %v611 = vpack.c.b16 %v596, %v595
    %v612 = vpack.c.b16 %v598, %v597
    %v613 = vpack.c.b16 %v600, %v599
    %v614 = vpack.c.b16 %v602, %v601
    %v615 = vpack.c.b16 %v604, %v603
    %v616 = vpack.c.b16 %v606, %v605
    %v617 = vpack.c.b16 %v608, %v607
    %v618 = vpack.c.b16 %v610, %v609
    %627 = vmatprep.subr.bf16.mxu0 0
    %628 = vmatpush1.bf16.msra.mxu0 %v618
    %629 = vmatprep.subr.bf16.mxu0 0
    %630 = vmatpush1.bf16.msra.mxu0 %v617
    %631 = vmatprep.subr.bf16.mxu0 0
    %632 = vmatpush1.bf16.msra.mxu0 %v616
    %633 = vmatprep.subr.bf16.mxu0 0
    %634 = vmatpush1.bf16.msra.mxu0 %v615
    %635 = vmatprep.subr.bf16.mxu0 0
    %636 = vmatpush1.bf16.msra.mxu0 %v614
    %637 = vmatprep.subr.bf16.mxu0 0
    %638 = vmatpush1.bf16.msra.mxu0 %v613
    %639 = vmatprep.subr.bf16.mxu0 0
    %640 = vmatpush1.bf16.msra.mxu0 %v612
    %641 = vmatprep.subr.bf16.mxu0 0
    %642 = vmatpush1.bf16.msra.mxu0 %v611
    %643 = vmatprep.subr.bf16.mxu0 0
    %644 = vmatpush2.bf16.msra.mxu0 0
    %645 = vmatprep.subr.bf16.mxu0 0
    %646 = vmatpush2.bf16.msra.mxu0 0
    %647 = vmatprep.subr.bf16.mxu0 0
    %648 = vmatpush2.bf16.msra.mxu0 0
    %649 = vmatprep.subr.bf16.mxu0 0
    %650 = vmatpush2.bf16.msra.mxu0 0
    %651 = vmatprep.subr.bf16.mxu0 0
    %652 = vmatpush2.bf16.msra.mxu0 0
    %653 = vmatprep.subr.bf16.mxu0 0
    %654 = vmatpush2.bf16.msra.mxu0 0
    %655 = vmatprep.subr.bf16.mxu0 0
    %656 = vmatpush2.bf16.msra.mxu0 0
    %657 = vmatprep.subr.bf16.mxu0 0
    %658 = vmatpush2.bf16.msra.mxu0 0
    %659 = vmatprep.mubr.bf16.mxu0 0
    %660 = vmatmul.mubr.bf16.gmra.mxu0 %v561
    %v661 = vpop.f32.mrf.mxu0
    %v662 = vadd.f32 0.0, %v661
    %v663 = vpop.f32.mrf.mxu0
    %v664 = vpop.f32.mrf.mxu0
    %v665 = vadd.f32 0.0, %v664
    %v666 = vpop.f32.mrf.mxu0
    %667 = vdwg.mxu0
    %s668 = scalar_lea.vmem [#allocation8], 4
    %v669 = vld [vmem:[%s668] sm:$0x1]
    %v670 = vpack.c.bf16 %v665, %v662
    %v671 = vpack.c.bf16 %v669, %v669
    %v673 = vpack.i.b16 %v671, %v671
    %v675 = vlaneseq
    %v676 = vshrl.u32 %v675, 7
    %v677 = vsub.s32 0, %v676
    %v678 = vrot.slane %v673, %v677
    %v679 = vadd.bf16 %v670, %v678
    %v680 = vmax.bf16 %v679, 0
    %s681 = scalar_lea.vmem [#allocation7], 256
    %v682 = vld [vmem:[%s681] sm:$0xf]
    %v683 = vld [vmem:[%s681 + $0x4] sm:$0xf]
    %v684 = vld [vmem:[%s681 + $0x8] sm:$0xf]
    %v685 = vld [vmem:[%s681 + $0xc] sm:$0xf]
    %v686 = vld [vmem:[%s681 + $0x10] sm:$0xf]
    %v687 = vld [vmem:[%s681 + $0x14] sm:$0xf]
    %v688 = vld [vmem:[%s681 + $0x18] sm:$0xf]
    %v689 = vld [vmem:[%s681 + $0x1c] sm:$0xf]
    %v690 = vld [vmem:[%s681 + $0x20] sm:$0xf]
    %v691 = vld [vmem:[%s681 + $0x24] sm:$0xf]
    %v692 = vld [vmem:[%s681 + $0x28] sm:$0xf]
    %v693 = vld [vmem:[%s681 + $0x2c] sm:$0xf]
    %v694 = vld [vmem:[%s681 + $0x30] sm:$0xf]
    %v695 = vld [vmem:[%s681 + $0x34] sm:$0xf]
    %v696 = vld [vmem:[%s681 + $0x38] sm:$0xf]
    %v697 = vld [vmem:[%s681 + $0x3c] sm:$0xf]
    %v714 = vunpack.c.l.b16 %v682
    %v715 = vunpack.c.l.b16 %v683
    %v716 = vunpack.c.l.b16 %v684
    %v717 = vunpack.c.l.b16 %v685
    %v718 = vunpack.c.l.b16 %v686
    %v719 = vunpack.c.l.b16 %v687
    %v720 = vunpack.c.l.b16 %v688
    %v721 = vunpack.c.l.b16 %v689
    %v722 = vunpack.c.l.b16 %v690
    %v723 = vunpack.c.l.b16 %v691
    %v724 = vunpack.c.l.b16 %v692
    %v725 = vunpack.c.l.b16 %v693
    %v726 = vunpack.c.l.b16 %v694
    %v727 = vunpack.c.l.b16 %v695
    %v728 = vunpack.c.l.b16 %v696
    %v729 = vunpack.c.l.b16 %v697
    %v730 = vpack.c.b16 %v715, %v714
    %v731 = vpack.c.b16 %v717, %v716
    %v732 = vpack.c.b16 %v719, %v718
    %v733 = vpack.c.b16 %v721, %v720
    %v734 = vpack.c.b16 %v723, %v722
    %v735 = vpack.c.b16 %v725, %v724
    %v736 = vpack.c.b16 %v727, %v726
    %v737 = vpack.c.b16 %v729, %v728
    %746 = vmatprep.subr.bf16.mxu0 0
    %747 = vmatpush1.bf16.msra.mxu0 %v737
    %748 = vmatprep.subr.bf16.mxu0 0
    %749 = vmatpush1.bf16.msra.mxu0 %v736
    %750 = vmatprep.subr.bf16.mxu0 0
    %751 = vmatpush1.bf16.msra.mxu0 %v735
    %752 = vmatprep.subr.bf16.mxu0 0
    %753 = vmatpush1.bf16.msra.mxu0 %v734
    %754 = vmatprep.subr.bf16.mxu0 0
    %755 = vmatpush1.bf16.msra.mxu0 %v733
    %756 = vmatprep.subr.bf16.mxu0 0
    %757 = vmatpush1.bf16.msra.mxu0 %v732
    %758 = vmatprep.subr.bf16.mxu0 0
    %759 = vmatpush1.bf16.msra.mxu0 %v731
    %760 = vmatprep.subr.bf16.mxu0 0
    %761 = vmatpush1.bf16.msra.mxu0 %v730
    %762 = vmatprep.subr.bf16.mxu0 0
    %763 = vmatpush2.bf16.msra.mxu0 0
    %764 = vmatprep.subr.bf16.mxu0 0
    %765 = vmatpush2.bf16.msra.mxu0 0
    %766 = vmatprep.subr.bf16.mxu0 0
    %767 = vmatpush2.bf16.msra.mxu0 0
    %768 = vmatprep.subr.bf16.mxu0 0
    %769 = vmatpush2.bf16.msra.mxu0 0
    %770 = vmatprep.subr.bf16.mxu0 0
    %771 = vmatpush2.bf16.msra.mxu0 0
    %772 = vmatprep.subr.bf16.mxu0 0
    %773 = vmatpush2.bf16.msra.mxu0 0
    %774 = vmatprep.subr.bf16.mxu0 0
    %775 = vmatpush2.bf16.msra.mxu0 0
    %776 = vmatprep.subr.bf16.mxu0 0
    %777 = vmatpush2.bf16.msra.mxu0 0
    %778 = vmatprep.mubr.bf16.mxu0 0
    %779 = vmatmul.mubr.bf16.gmra.mxu0 %v680
    %v780 = vpop.f32.mrf.mxu0
    %v781 = vadd.f32 0.0, %v780
    %v782 = vpop.f32.mrf.mxu0
    %v783 = vpop.f32.mrf.mxu0
    %v784 = vadd.f32 0.0, %v783
    %v785 = vpop.f32.mrf.mxu0
    %786 = vdwg.mxu0
    %s787 = scalar_lea.vmem [#allocation8], 5
    %v788 = vld [vmem:[%s787] sm:$0x1]
    %v789 = vpack.c.bf16 %v784, %v781
    %v790 = vpack.c.bf16 %v788, %v788
    %v792 = vpack.i.b16 %v790, %v790
    %v794 = vlaneseq
    %v795 = vshrl.u32 %v794, 7
    %v796 = vsub.s32 0, %v795
    %v797 = vrot.slane %v792, %v796
    %v798 = vadd.bf16 %v789, %v797
    %v799 = vmax.bf16 %v798, 0
    %s800 = scalar_lea.vmem [#allocation7], 320
    %v801 = vld [vmem:[%s800] sm:$0xf]
    %v802 = vld [vmem:[%s800 + $0x4] sm:$0xf]
    %v803 = vld [vmem:[%s800 + $0x8] sm:$0xf]
    %v804 = vld [vmem:[%s800 + $0xc] sm:$0xf]
    %v805 = vld [vmem:[%s800 + $0x10] sm:$0xf]
    %v806 = vld [vmem:[%s800 + $0x14] sm:$0xf]
    %v807 = vld [vmem:[%s800 + $0x18] sm:$0xf]
    %v808 = vld [vmem:[%s800 + $0x1c] sm:$0xf]
    %v809 = vld [vmem:[%s800 + $0x20] sm:$0xf]
    %v810 = vld [vmem:[%s800 + $0x24] sm:$0xf]
    %v811 = vld [vmem:[%s800 + $0x28] sm:$0xf]
    %v812 = vld [vmem:[%s800 + $0x2c] sm:$0xf]
    %v813 = vld [vmem:[%s800 + $0x30] sm:$0xf]
    %v814 = vld [vmem:[%s800 + $0x34] sm:$0xf]
    %v815 = vld [vmem:[%s800 + $0x38] sm:$0xf]
    %v816 = vld [vmem:[%s800 + $0x3c] sm:$0xf]
    %v833 = vunpack.c.l.b16 %v801
    %v834 = vunpack.c.l.b16 %v802
    %v835 = vunpack.c.l.b16 %v803
    %v836 = vunpack.c.l.b16 %v804
    %v837 = vunpack.c.l.b16 %v805
    %v838 = vunpack.c.l.b16 %v806
    %v839 = vunpack.c.l.b16 %v807
    %v840 = vunpack.c.l.b16 %v808
    %v841 = vunpack.c.l.b16 %v809
    %v842 = vunpack.c.l.b16 %v810
    %v843 = vunpack.c.l.b16 %v811
    %v844 = vunpack.c.l.b16 %v812
    %v845 = vunpack.c.l.b16 %v813
    %v846 = vunpack.c.l.b16 %v814
    %v847 = vunpack.c.l.b16 %v815
    %v848 = vunpack.c.l.b16 %v816
    %v849 = vpack.c.b16 %v834, %v833
    %v850 = vpack.c.b16 %v836, %v835
    %v851 = vpack.c.b16 %v838, %v837
    %v852 = vpack.c.b16 %v840, %v839
    %v853 = vpack.c.b16 %v842, %v841
    %v854 = vpack.c.b16 %v844, %v843
    %v855 = vpack.c.b16 %v846, %v845
    %v856 = vpack.c.b16 %v848, %v847
    %865 = vmatprep.subr.bf16.mxu0 0
    %866 = vmatpush1.bf16.msra.mxu0 %v856
    %867 = vmatprep.subr.bf16.mxu0 0
    %868 = vmatpush1.bf16.msra.mxu0 %v855
    %869 = vmatprep.subr.bf16.mxu0 0
    %870 = vmatpush1.bf16.msra.mxu0 %v854
    %871 = vmatprep.subr.bf16.mxu0 0
    %872 = vmatpush1.bf16.msra.mxu0 %v853
    %873 = vmatprep.subr.bf16.mxu0 0
    %874 = vmatpush1.bf16.msra.mxu0 %v852
    %875 = vmatprep.subr.bf16.mxu0 0
    %876 = vmatpush1.bf16.msra.mxu0 %v851
    %877 = vmatprep.subr.bf16.mxu0 0
    %878 = vmatpush1.bf16.msra.mxu0 %v850
    %879 = vmatprep.subr.bf16.mxu0 0
    %880 = vmatpush1.bf16.msra.mxu0 %v849
    %881 = vmatprep.subr.bf16.mxu0 0
    %882 = vmatpush2.bf16.msra.mxu0 0
    %883 = vmatprep.subr.bf16.mxu0 0
    %884 = vmatpush2.bf16.msra.mxu0 0
    %885 = vmatprep.subr.bf16.mxu0 0
    %886 = vmatpush2.bf16.msra.mxu0 0
    %887 = vmatprep.subr.bf16.mxu0 0
    %888 = vmatpush2.bf16.msra.mxu0 0
    %889 = vmatprep.subr.bf16.mxu0 0
    %890 = vmatpush2.bf16.msra.mxu0 0
    %891 = vmatprep.subr.bf16.mxu0 0
    %892 = vmatpush2.bf16.msra.mxu0 0
    %893 = vmatprep.subr.bf16.mxu0 0
    %894 = vmatpush2.bf16.msra.mxu0 0
    %895 = vmatprep.subr.bf16.mxu0 0
    %896 = vmatpush2.bf16.msra.mxu0 0
    %897 = vmatprep.mubr.bf16.mxu0 0
    %898 = vmatmul.mubr.bf16.gmra.mxu0 %v799
    %v899 = vpop.f32.mrf.mxu0
    %v900 = vadd.f32 0.0, %v899
    %v901 = vpop.f32.mrf.mxu0
    %v902 = vpop.f32.mrf.mxu0
    %v903 = vadd.f32 0.0, %v902
    %v904 = vpop.f32.mrf.mxu0
    %905 = vdwg.mxu0
    %s906 = scalar_lea.vmem [#allocation8], 6
    %v907 = vld [vmem:[%s906] sm:$0x1]
    %v908 = vpack.c.bf16 %v903, %v900
    %v909 = vpack.c.bf16 %v907, %v907
    %v911 = vpack.i.b16 %v909, %v909
    %v913 = vlaneseq
    %v914 = vshrl.u32 %v913, 7
    %v915 = vsub.s32 0, %v914
    %v916 = vrot.slane %v911, %v915
    %v917 = vadd.bf16 %v908, %v916
    %v918 = vmax.bf16 %v917, 0
    %s919 = scalar_lea.vmem [#allocation7], 384
    %v920 = vld [vmem:[%s919] sm:$0xf]
    %v921 = vld [vmem:[%s919 + $0x4] sm:$0xf]
    %v922 = vld [vmem:[%s919 + $0x8] sm:$0xf]
    %v923 = vld [vmem:[%s919 + $0xc] sm:$0xf]
    %v924 = vld [vmem:[%s919 + $0x10] sm:$0xf]
    %v925 = vld [vmem:[%s919 + $0x14] sm:$0xf]
    %v926 = vld [vmem:[%s919 + $0x18] sm:$0xf]
    %v927 = vld [vmem:[%s919 + $0x1c] sm:$0xf]
    %v928 = vld [vmem:[%s919 + $0x20] sm:$0xf]
    %v929 = vld [vmem:[%s919 + $0x24] sm:$0xf]
    %v930 = vld [vmem:[%s919 + $0x28] sm:$0xf]
    %v931 = vld [vmem:[%s919 + $0x2c] sm:$0xf]
    %v932 = vld [vmem:[%s919 + $0x30] sm:$0xf]
    %v933 = vld [vmem:[%s919 + $0x34] sm:$0xf]
    %v934 = vld [vmem:[%s919 + $0x38] sm:$0xf]
    %v935 = vld [vmem:[%s919 + $0x3c] sm:$0xf]
    %v952 = vunpack.c.l.b16 %v920
    %v953 = vunpack.c.l.b16 %v921
    %v954 = vunpack.c.l.b16 %v922
    %v955 = vunpack.c.l.b16 %v923
    %v956 = vunpack.c.l.b16 %v924
    %v957 = vunpack.c.l.b16 %v925
    %v958 = vunpack.c.l.b16 %v926
    %v959 = vunpack.c.l.b16 %v927
    %v960 = vunpack.c.l.b16 %v928
    %v961 = vunpack.c.l.b16 %v929
    %v962 = vunpack.c.l.b16 %v930
    %v963 = vunpack.c.l.b16 %v931
    %v964 = vunpack.c.l.b16 %v932
    %v965 = vunpack.c.l.b16 %v933
    %v966 = vunpack.c.l.b16 %v934
    %v967 = vunpack.c.l.b16 %v935
    %v968 = vpack.c.b16 %v953, %v952
    %v969 = vpack.c.b16 %v955, %v954
    %v970 = vpack.c.b16 %v957, %v956
    %v971 = vpack.c.b16 %v959, %v958
    %v972 = vpack.c.b16 %v961, %v960
    %v973 = vpack.c.b16 %v963, %v962
    %v974 = vpack.c.b16 %v965, %v964
    %v975 = vpack.c.b16 %v967, %v966
    %984 = vmatprep.subr.bf16.mxu0 0
    %985 = vmatpush1.bf16.msra.mxu0 %v975
    %986 = vmatprep.subr.bf16.mxu0 0
    %987 = vmatpush1.bf16.msra.mxu0 %v974
    %988 = vmatprep.subr.bf16.mxu0 0
    %989 = vmatpush1.bf16.msra.mxu0 %v973
    %990 = vmatprep.subr.bf16.mxu0 0
    %991 = vmatpush1.bf16.msra.mxu0 %v972
    %992 = vmatprep.subr.bf16.mxu0 0
    %993 = vmatpush1.bf16.msra.mxu0 %v971
    %994 = vmatprep.subr.bf16.mxu0 0
    %995 = vmatpush1.bf16.msra.mxu0 %v970
    %996 = vmatprep.subr.bf16.mxu0 0
    %997 = vmatpush1.bf16.msra.mxu0 %v969
    %998 = vmatprep.subr.bf16.mxu0 0
    %999 = vmatpush1.bf16.msra.mxu0 %v968
    %1000 = vmatprep.subr.bf16.mxu0 0
    %1001 = vmatpush2.bf16.msra.mxu0 0
    %1002 = vmatprep.subr.bf16.mxu0 0
    %1003 = vmatpush2.bf16.msra.mxu0 0
    %1004 = vmatprep.subr.bf16.mxu0 0
    %1005 = vmatpush2.bf16.msra.mxu0 0
    %1006 = vmatprep.subr.bf16.mxu0 0
    %1007 = vmatpush2.bf16.msra.mxu0 0
    %1008 = vmatprep.subr.bf16.mxu0 0
    %1009 = vmatpush2.bf16.msra.mxu0 0
    %1010 = vmatprep.subr.bf16.mxu0 0
    %1011 = vmatpush2.bf16.msra.mxu0 0
    %1012 = vmatprep.subr.bf16.mxu0 0
    %1013 = vmatpush2.bf16.msra.mxu0 0
    %1014 = vmatprep.subr.bf16.mxu0 0
    %1015 = vmatpush2.bf16.msra.mxu0 0
    %1016 = vmatprep.mubr.bf16.mxu0 0
    %1017 = vmatmul.mubr.bf16.gmra.mxu0 %v918
    %v1018 = vpop.f32.mrf.mxu0
    %v1019 = vadd.f32 0.0, %v1018
    %v1020 = vpop.f32.mrf.mxu0
    %v1021 = vpop.f32.mrf.mxu0
    %v1022 = vadd.f32 0.0, %v1021
    %v1023 = vpop.f32.mrf.mxu0
    %1024 = vdwg.mxu0
    %s1025 = scalar_lea.vmem [#allocation8], 7
    %v1026 = vld [vmem:[%s1025] sm:$0x1]
    %v1027 = vpack.c.bf16 %v1022, %v1019
    %v1028 = vpack.c.bf16 %v1026, %v1026
    %v1030 = vpack.i.b16 %v1028, %v1028
    %v1032 = vlaneseq
    %v1033 = vshrl.u32 %v1032, 7
    %v1034 = vsub.s32 0, %v1033
    %v1035 = vrot.slane %v1030, %v1034
    %v1036 = vadd.bf16 %v1027, %v1035
    %v1037 = vmax.bf16 %v1036, 0
    %s1038 = scalar_lea.vmem [#allocation7], 448
    %v1039 = vld [vmem:[%s1038] sm:$0xf]
    %v1040 = vld [vmem:[%s1038 + $0x4] sm:$0xf]
    %v1041 = vld [vmem:[%s1038 + $0x8] sm:$0xf]
    %v1042 = vld [vmem:[%s1038 + $0xc] sm:$0xf]
    %v1043 = vld [vmem:[%s1038 + $0x10] sm:$0xf]
    %v1044 = vld [vmem:[%s1038 + $0x14] sm:$0xf]
    %v1045 = vld [vmem:[%s1038 + $0x18] sm:$0xf]
    %v1046 = vld [vmem:[%s1038 + $0x1c] sm:$0xf]
    %v1047 = vld [vmem:[%s1038 + $0x20] sm:$0xf]
    %v1048 = vld [vmem:[%s1038 + $0x24] sm:$0xf]
    %v1049 = vld [vmem:[%s1038 + $0x28] sm:$0xf]
    %v1050 = vld [vmem:[%s1038 + $0x2c] sm:$0xf]
    %v1051 = vld [vmem:[%s1038 + $0x30] sm:$0xf]
    %v1052 = vld [vmem:[%s1038 + $0x34] sm:$0xf]
    %v1053 = vld [vmem:[%s1038 + $0x38] sm:$0xf]
    %v1054 = vld [vmem:[%s1038 + $0x3c] sm:$0xf]
    %v1071 = vunpack.c.l.b16 %v1039
    %v1072 = vunpack.c.l.b16 %v1040
    %v1073 = vunpack.c.l.b16 %v1041
    %v1074 = vunpack.c.l.b16 %v1042
    %v1075 = vunpack.c.l.b16 %v1043
    %v1076 = vunpack.c.l.b16 %v1044
    %v1077 = vunpack.c.l.b16 %v1045
    %v1078 = vunpack.c.l.b16 %v1046
    %v1079 = vunpack.c.l.b16 %v1047
    %v1080 = vunpack.c.l.b16 %v1048
    %v1081 = vunpack.c.l.b16 %v1049
    %v1082 = vunpack.c.l.b16 %v1050
    %v1083 = vunpack.c.l.b16 %v1051
    %v1084 = vunpack.c.l.b16 %v1052
    %v1085 = vunpack.c.l.b16 %v1053
    %v1086 = vunpack.c.l.b16 %v1054
    %v1087 = vpack.c.b16 %v1072, %v1071
    %v1088 = vpack.c.b16 %v1074, %v1073
    %v1089 = vpack.c.b16 %v1076, %v1075
    %v1090 = vpack.c.b16 %v1078, %v1077
    %v1091 = vpack.c.b16 %v1080, %v1079
    %v1092 = vpack.c.b16 %v1082, %v1081
    %v1093 = vpack.c.b16 %v1084, %v1083
    %v1094 = vpack.c.b16 %v1086, %v1085
    %1103 = vmatprep.subr.bf16.mxu0 0
    %1104 = vmatpush1.bf16.msra.mxu0 %v1094
    %1105 = vmatprep.subr.bf16.mxu0 0
    %1106 = vmatpush1.bf16.msra.mxu0 %v1093
    %1107 = vmatprep.subr.bf16.mxu0 0
    %1108 = vmatpush1.bf16.msra.mxu0 %v1092
    %1109 = vmatprep.subr.bf16.mxu0 0
    %1110 = vmatpush1.bf16.msra.mxu0 %v1091
    %1111 = vmatprep.subr.bf16.mxu0 0
    %1112 = vmatpush1.bf16.msra.mxu0 %v1090
    %1113 = vmatprep.subr.bf16.mxu0 0
    %1114 = vmatpush1.bf16.msra.mxu0 %v1089
    %1115 = vmatprep.subr.bf16.mxu0 0
    %1116 = vmatpush1.bf16.msra.mxu0 %v1088
    %1117 = vmatprep.subr.bf16.mxu0 0
    %1118 = vmatpush1.bf16.msra.mxu0 %v1087
    %1119 = vmatprep.subr.bf16.mxu0 0
    %1120 = vmatpush2.bf16.msra.mxu0 0
    %1121 = vmatprep.subr.bf16.mxu0 0
    %1122 = vmatpush2.bf16.msra.mxu0 0
    %1123 = vmatprep.subr.bf16.mxu0 0
    %1124 = vmatpush2.bf16.msra.mxu0 0
    %1125 = vmatprep.subr.bf16.mxu0 0
    %1126 = vmatpush2.bf16.msra.mxu0 0
    %1127 = vmatprep.subr.bf16.mxu0 0
    %1128 = vmatpush2.bf16.msra.mxu0 0
    %1129 = vmatprep.subr.bf16.mxu0 0
    %1130 = vmatpush2.bf16.msra.mxu0 0
    %1131 = vmatprep.subr.bf16.mxu0 0
    %1132 = vmatpush2.bf16.msra.mxu0 0
    %1133 = vmatprep.subr.bf16.mxu0 0
    %1134 = vmatpush2.bf16.msra.mxu0 0
    %1135 = vmatprep.mubr.bf16.mxu0 0
    %1136 = vmatmul.mubr.bf16.gmra.mxu0 %v1037
    %v1137 = vpop.f32.mrf.mxu0
    %v1138 = vadd.f32 0.0, %v1137
    %v1139 = vpop.f32.mrf.mxu0
    %v1140 = vpop.f32.mrf.mxu0
    %v1141 = vadd.f32 0.0, %v1140
    %v1142 = vpop.f32.mrf.mxu0
    %1143 = vdwg.mxu0
    %s1144 = scalar_lea.vmem [#allocation8], 8
    %v1145 = vld [vmem:[%s1144] sm:$0x1]
    %v1146 = vpack.c.bf16 %v1141, %v1138
    %v1147 = vpack.c.bf16 %v1145, %v1145
    %v1149 = vpack.i.b16 %v1147, %v1147
    %v1151 = vlaneseq
    %v1152 = vshrl.u32 %v1151, 7
    %v1153 = vsub.s32 0, %v1152
    %v1154 = vrot.slane %v1149, %v1153
    %v1155 = vadd.bf16 %v1146, %v1154
    %v1156 = vmax.bf16 %v1155, 0
    %s1157 = scalar_lea.vmem [#allocation7], 512
    %v1158 = vld [vmem:[%s1157] sm:$0xf]
    %v1159 = vld [vmem:[%s1157 + $0x4] sm:$0xf]
    %v1160 = vld [vmem:[%s1157 + $0x8] sm:$0xf]
    %v1161 = vld [vmem:[%s1157 + $0xc] sm:$0xf]
    %v1162 = vld [vmem:[%s1157 + $0x10] sm:$0xf]
    %v1163 = vld [vmem:[%s1157 + $0x14] sm:$0xf]
    %v1164 = vld [vmem:[%s1157 + $0x18] sm:$0xf]
    %v1165 = vld [vmem:[%s1157 + $0x1c] sm:$0xf]
    %v1166 = vld [vmem:[%s1157 + $0x20] sm:$0xf]
    %v1167 = vld [vmem:[%s1157 + $0x24] sm:$0xf]
    %v1168 = vld [vmem:[%s1157 + $0x28] sm:$0xf]
    %v1169 = vld [vmem:[%s1157 + $0x2c] sm:$0xf]
    %v1170 = vld [vmem:[%s1157 + $0x30] sm:$0xf]
    %v1171 = vld [vmem:[%s1157 + $0x34] sm:$0xf]
    %v1172 = vld [vmem:[%s1157 + $0x38] sm:$0xf]
    %v1173 = vld [vmem:[%s1157 + $0x3c] sm:$0xf]
    %s1174 = scalar_lea.vmem [#allocation8], 9
    %v1175 = vld [vmem:[%s1174] sm:$0x1]
    %v1177 = vlaneseq
    %v1178 = vshrl.u32 %v1177, 7
    %v1179 = vsub.s32 0, %v1178
    %v1180 = vrot.slane %v1175, %v1179
    %v1198 = vunpack.c.l.b16 %v1158
    %v1199 = vunpack.c.l.b16 %v1159
    %v1200 = vunpack.c.l.b16 %v1160
    %v1201 = vunpack.c.l.b16 %v1161
    %v1202 = vunpack.c.l.b16 %v1162
    %v1203 = vunpack.c.l.b16 %v1163
    %v1204 = vunpack.c.l.b16 %v1164
    %v1205 = vunpack.c.l.b16 %v1165
    %v1206 = vunpack.c.l.b16 %v1166
    %v1207 = vunpack.c.l.b16 %v1167
    %v1208 = vunpack.c.l.b16 %v1168
    %v1209 = vunpack.c.l.b16 %v1169
    %v1210 = vunpack.c.l.b16 %v1170
    %v1211 = vunpack.c.l.b16 %v1171
    %v1212 = vunpack.c.l.b16 %v1172
    %v1213 = vunpack.c.l.b16 %v1173
    %v1214 = vpack.c.b16 %v1199, %v1198
    %v1215 = vpack.c.b16 %v1201, %v1200
    %v1216 = vpack.c.b16 %v1203, %v1202
    %v1217 = vpack.c.b16 %v1205, %v1204
    %v1218 = vpack.c.b16 %v1207, %v1206
    %v1219 = vpack.c.b16 %v1209, %v1208
    %v1220 = vpack.c.b16 %v1211, %v1210
    %v1221 = vpack.c.b16 %v1213, %v1212
    %1230 = vmatprep.subr.bf16.mxu0 0
    %1231 = vmatpush1.bf16.msra.mxu0 %v1221
    %1232 = vmatprep.subr.bf16.mxu0 0
    %1233 = vmatpush1.bf16.msra.mxu0 %v1220
    %1234 = vmatprep.subr.bf16.mxu0 0
    %1235 = vmatpush1.bf16.msra.mxu0 %v1219
    %1236 = vmatprep.subr.bf16.mxu0 0
    %1237 = vmatpush1.bf16.msra.mxu0 %v1218
    %1238 = vmatprep.subr.bf16.mxu0 0
    %1239 = vmatpush1.bf16.msra.mxu0 %v1217
    %1240 = vmatprep.subr.bf16.mxu0 0
    %1241 = vmatpush1.bf16.msra.mxu0 %v1216
    %1242 = vmatprep.subr.bf16.mxu0 0
    %1243 = vmatpush1.bf16.msra.mxu0 %v1215
    %1244 = vmatprep.subr.bf16.mxu0 0
    %1245 = vmatpush1.bf16.msra.mxu0 %v1214
    %1246 = vmatprep.subr.bf16.mxu0 0
    %1247 = vmatpush2.bf16.msra.mxu0 0
    %1248 = vmatprep.subr.bf16.mxu0 0
    %1249 = vmatpush2.bf16.msra.mxu0 0
    %1250 = vmatprep.subr.bf16.mxu0 0
    %1251 = vmatpush2.bf16.msra.mxu0 0
    %1252 = vmatprep.subr.bf16.mxu0 0
    %1253 = vmatpush2.bf16.msra.mxu0 0
    %1254 = vmatprep.subr.bf16.mxu0 0
    %1255 = vmatpush2.bf16.msra.mxu0 0
    %1256 = vmatprep.subr.bf16.mxu0 0
    %1257 = vmatpush2.bf16.msra.mxu0 0
    %1258 = vmatprep.subr.bf16.mxu0 0
    %1259 = vmatpush2.bf16.msra.mxu0 0
    %1260 = vmatprep.subr.bf16.mxu0 0
    %1261 = vmatpush2.bf16.msra.mxu0 0
    %1262 = vmatprep.mubr.bf16.mxu0 0
    %1263 = vmatmul.mubr.bf16.gmra.mxu0 %v1156
    %v1264 = vpop.f32.mrf.mxu0
    %v1265 = vadd.f32 %v1180, %v1264
    %v1266 = vpop.f32.mrf.mxu0
    %v1267 = vpop.f32.mrf.mxu0
    %v1268 = vadd.f32 %v1180, %v1267
    %v1269 = vpop.f32.mrf.mxu0
    %1270 = vdwg.mxu0
    %v1271 = vmax.f32 %v1265, 0.0
    %v1272 = vmax.f32 %v1268, 0.0
    %v1273 = vld [vmem:[%s4] sm:$0x1]
    %v1275 = vlaneseq
    %v1276 = vshrl.u32 %v1275, 7
    %v1277 = vsub.s32 0, %v1276
    %v1278 = vrot.slane %v1273, %v1277
    %v1280 = vmul.f32 %v1271, %v1278
    %v1281 = vmul.f32 %v1272, %v1278
    %1282 = vadd.xlane.f32.xlu0 %v1280
    %v1283 = vpop.xlane.xlu0 %1282
    %1284 = vadd.xlane.f32.xlu0 %v1281
    %v1285 = vpop.xlane.xlu0 %1284
    %v1286 = vld [vmem:[#allocation2] sm:$0x1]
    %v1288 = vlaneseq
    %v1289 = vshrl.u32 %v1288, 7
    %v1290 = vsub.s32 0, %v1289
    %v1291 = vrot.slane %v1286, %v1290
    %v1293 = vadd.f32 %v1283, %v1291
    %v1294 = vadd.f32 %v1285, %v1291
    %vm1295 = vcmask 7168
    %1296 = vst.msk [vmem:[%s6] sm:$0xff] %vm1295, %v1293
    %1297 = vst.msk [vmem:[%s6 + $0x8] sm:$0xff] %vm1295, %v1294
    // Predicated region
    $region42: #{tpu_custom_call.1} parent=1 // pred_check
      _
    $region43: #{tpu_custom_call.1} parent=1 // pred_check_branch
      %1299 = sbr.rel (0) target = $region45
    $region44: #{tpu_custom_call.1} parent=1 // pred_region
      _
    $region45: #{tpu_custom_call.1} parent=1 // pred_fallthru
      _
    // Predicated region
    $region46: #{tpu_custom_call.1} parent=1 // pred_check
      _
    $region47: #{tpu_custom_call.1} parent=1 // pred_check_branch
      %1301 = sbr.rel (0) target = $region49
    $region48: #{tpu_custom_call.1} parent=1 // pred_region
      _
    $region49: #{tpu_custom_call.1} parent=1 // pred_fallthru
      _
    %1302 = vsyncpa [#allocation4], 1
    %1303 = vsyncpa [#allocation6], 1
    %1304 = vsyncpa [#allocation9], 1

</llo_original>
